<compile_context>
chip_gen: v7x
topology: tpu7x:2x2x1
jax: 0.10.0
libtpu: 0.0.40
codegen_flags: <defaults>
</compile_context>

<pallas_src>
import functools
import math

import jax
import jax.numpy as jnp
import numpy as np
from jax.experimental import pallas as pl
from jax.experimental.pallas import tpu as pltpu


def _attention_kernel(x_ref, *refs, B, S, H, num_heads, head_dim,
                      has_vmul, fast_math):
    if has_vmul:
        vmul_ref, wqkv_ref, bqkv_ref, wo_ref, bo_ref, out_ref = refs
    else:
        wqkv_ref, bqkv_ref, wo_ref, bo_ref, out_ref = refs

    x = x_ref[...]                                        # (B*S, H)
    mm_dtype = jnp.bfloat16 if fast_math else x.dtype     # MXU operand dtype only

    # One fused QKV projection over the whole flattened batch on the MXU.
    # (softmax scale already folded, in f32, into the Q columns/bias.)
    qkv = jnp.dot(x.astype(mm_dtype), wqkv_ref[...].astype(mm_dtype),
                  preferred_element_type=jnp.float32) + bqkv_ref[...]
    # NOTE: at H=32 these lane-axis slices relayout small copies; at
    # production H (multiple of 128) the cut points are tile-aligned.
    q = qkv[:, :H]
    k = qkv[:, H:2 * H]
    v = qkv[:, 2 * H:]
    if has_vmul:
        v = v * vmul_ref[...]          # refine multiplier (only streamed if given)

    # Head-major (B*nh, S, d) tensors; reshape/transpose done exactly once per
    # operand, then batched MXU contractions (no per-head Python loop).
    def heads(t):
        t = t.reshape(B, S, num_heads, head_dim)
        t = jnp.transpose(t, (0, 2, 1, 3))                # (B, nh, S, d)
        return t.reshape(B * num_heads, S, head_dim)

    qh = heads(q).astype(mm_dtype)
    kh = heads(k).astype(mm_dtype)
    vh = heads(v).astype(mm_dtype)

    # Scores already include the 1/sqrt(d) factor.  Softmax stays in f32 on
    # all generations (v5e has no bf16 VPU/EUP).
    scores = jnp.einsum('hqd,hkd->hqk', qh, kh,
                        preferred_element_type=jnp.float32)
    scores = scores - jnp.max(scores, axis=-1, keepdims=True)
    p = jnp.exp(scores)
    denom = jnp.sum(p, axis=-1, keepdims=True)
    p = p * pl.reciprocal(denom, approx=fast_math)        # EUP vrcp when fast

    ctx = jnp.einsum('hqk,hkd->hqd', p.astype(mm_dtype), vh,
                     preferred_element_type=jnp.float32)  # (B*nh, S, d)

    # "Concatenate heads" back into a lane-dense (B*S, H) slab and fuse the
    # output projection + head reduction into ONE (B*S, H) @ (H, H) matmul.
    ctx = ctx.reshape(B, num_heads, S, head_dim)
    ctx = jnp.transpose(ctx, (0, 2, 1, 3)).reshape(B * S, H)
    out = jnp.dot(ctx.astype(mm_dtype), wo_ref[...].astype(mm_dtype),
                  preferred_element_type=jnp.float32) + bo_ref[...]
    out_ref[...] = out.astype(out_ref.dtype)


def attention_forward(hidden_states, params, num_heads, refine=None,
                      fast_math=False):
    """Attention forward pass as a single Pallas invocation (no grid)."""
    B, S, H = hidden_states.shape
    head_dim = H // num_heads
    scale = 1.0 / math.sqrt(head_dim)

    # PyTorch Linear weights are (out, in) -> transpose to (in, out).
    # Fold the softmax scale into the Q projection (kept in f32); fuse Q/K/V.
    wq = params["wq"].T.astype(jnp.float32) * scale                       # (H, H)
    bq = params["bq"].astype(jnp.float32) * scale                         # (H,)
    wqkv = jnp.concatenate([wq, params["wk"].T, params["wv"].T], axis=1)  # (H, 3H)
    bqkv = jnp.concatenate([bq, params["bk"], params["bv"]]).reshape(1, 3 * H)
    wo = params["wo"].T                                                   # (H, H)
    bo = params["bo"].reshape(1, H)

    x_flat = hidden_states.reshape(B * S, H)

    has_vmul = refine is not None
    inputs = [x_flat]
    if has_vmul:
        b_, c, hh, ww = refine.shape
        assert c == H and hh * ww == S and b_ == B
        # rearrange 'b c h w -> b (h w) c', flattened to (B*S, H)
        vmul = jnp.transpose(refine, (0, 2, 3, 1)).reshape(B * S, H)
        inputs.append(vmul)
    inputs += [wqkv, bqkv, wo, bo]

    # No grid -> every operand is a single, single-buffered VMEM block.
    vmem_spec = pl.BlockSpec(memory_space=pltpu.MemorySpace.VMEM)

    kernel = functools.partial(
        _attention_kernel, B=B, S=S, H=H, num_heads=num_heads,
        head_dim=head_dim, has_vmul=has_vmul, fast_math=fast_math)

    out_flat = pl.pallas_call(
        kernel,
        out_shape=jax.ShapeDtypeStruct((B * S, H), hidden_states.dtype),
        in_specs=[vmem_spec] * len(inputs),
        out_specs=vmem_spec,
    )(*inputs)
    return out_flat.reshape(B, S, H)


def attention_reference(x, params, num_heads, refine=None):
    """Pure-JAX reference mirroring the PyTorch forward (dropout = identity)."""
    B, S, H = x.shape
    d = H // num_heads
    q = x @ params["wq"].T + params["bq"]
    k = x @ params["wk"].T + params["bk"]
    v = x @ params["wv"].T + params["bv"]
    if refine is not None:
        v = v * jnp.transpose(refine, (0, 2, 3, 1)).reshape(B, S, H)

    def split_heads(t):
        return jnp.transpose(t.reshape(B, S, num_heads, d), (0, 2, 1, 3))

    qh, kh, vh = split_heads(q), split_heads(k), split_heads(v)
    scores = jnp.einsum("bhqd,bhkd->bhqk", qh, kh) / math.sqrt(d)
    probs = jax.nn.softmax(scores, axis=-1)
    ctx = jnp.einsum("bhqk,bhkd->bhqd", probs, vh)
    ctx = jnp.transpose(ctx, (0, 2, 1, 3)).reshape(B, S, H)
    return ctx @ params["wo"].T + params["bo"]


if __name__ == "__main__":
    # Small config consistent with the module: hidden_size=32, num_heads=4,
    # seq=8 (= 2x4 spatial for refine), batch=2.
    B, S, H = 2, 8, 32
    num_heads = 4
    hs, ws = 2, 4  # spatial dims of refine, hs*ws == S

    key = jax.random.PRNGKey(0)
    keys = jax.random.split(key, 10)

    def init_linear(kw, kb, out_f, in_f):
        bound = 1.0 / math.sqrt(in_f)
        w = jax.random.uniform(kw, (out_f, in_f), jnp.float32, -bound, bound)
        b = jax.random.uniform(kb, (out_f,), jnp.float32, -bound, bound)
        return w, b

    wq, bq = init_linear(keys[0], keys[1], H, H)
    wk, bk = init_linear(keys[2], keys[3], H, H)
    wv, bv = init_linear(keys[4], keys[5], H, H)
    wo, bo = init_linear(keys[6], keys[7], H, H)
    params = dict(wq=wq, bq=bq, wk=wk, bk=bk, wv=wv, bv=bv, wo=wo, bo=bo)

    x = jax.random.normal(keys[8], (B, S, H), jnp.float32)
    refine = jax.random.normal(keys[9], (B, H, hs, ws), jnp.float32)

    # TODO(synk): attn_dropout / proj_dropout are identity here (eval-mode forward).

    # --- precise path (f32 matmuls, exact reciprocal) -----------------------
    out = jax.block_until_ready(attention_forward(x, params, num_heads))
    ref = attention_reference(x, params, num_heads)
    np.testing.assert_allclose(np.asarray(out), np.asarray(ref),
                               rtol=1e-5, atol=1e-5)

    out_r = jax.block_until_ready(
        attention_forward(x, params, num_heads, refine=refine))
    ref_r = attention_reference(x, params, num_heads, refine=refine)
    np.testing.assert_allclose(np.asarray(out_r), np.asarray(ref_r),
                               rtol=1e-5, atol=1e-5)

    # --- fast path (bf16 MXU operands, f32 softmax/accum, EUP recip) --------
    out_f = jax.block_until_ready(
        attention_forward(x, params, num_heads, fast_math=True))
    np.testing.assert_allclose(np.asarray(out_f), np.asarray(ref),
                               rtol=2e-2, atol=2e-2)

    out_fr = jax.block_until_ready(
        attention_forward(x, params, num_heads, refine=refine, fast_math=True))
    np.testing.assert_allclose(np.asarray(out_fr), np.asarray(ref_r),
                               rtol=2e-2, atol=2e-2)

    print("KERNEL_OK")
</pallas_src>

<mosaic_0001>
module attributes {stable_mosaic.version = 11 : i64} {
  func.func @_attention_kernel(%arg0: memref<16x32xf32, #tpu.memory_space<vmem>>, %arg1: memref<32x96xf32, #tpu.memory_space<vmem>>, %arg2: memref<1x96xf32, #tpu.memory_space<vmem>>, %arg3: memref<32x32xf32, #tpu.memory_space<vmem>>, %arg4: memref<1x32xf32, #tpu.memory_space<vmem>>, %arg5: memref<16x32xf32, #tpu.memory_space<vmem>>) attributes {dimension_semantics = [], scalar_prefetch = 0 : i64, scratch_operands = 0 : i64, tpu.core_type = #tpu.core_type<tc>} {
    %c0 = arith.constant 0 : index
    %c0_0 = arith.constant 0 : index
    %0 = vector.load %arg0[%c0, %c0_0] : memref<16x32xf32, #tpu.memory_space<vmem>>, vector<16x32xf32>
    %c0_1 = arith.constant 0 : index
    %c0_2 = arith.constant 0 : index
    %1 = vector.load %arg1[%c0_1, %c0_2] : memref<32x96xf32, #tpu.memory_space<vmem>>, vector<32x96xf32>
    %cst = arith.constant dense<0.000000e+00> : vector<16x96xf32>
    %2 = tpu.matmul %0, %1, %cst {dimension_numbers = #tpu.dot_dimension_numbers<[1], [0], [0], [1], [0, 0, 1, 1], [], []>} : vector<16x32xf32>, vector<32x96xf32>, vector<16x96xf32> -> vector<16x96xf32>
    %c0_3 = arith.constant 0 : index
    %c0_4 = arith.constant 0 : index
    %3 = vector.load %arg2[%c0_3, %c0_4] : memref<1x96xf32, #tpu.memory_space<vmem>>, vector<1x96xf32>
    %4 = vector.broadcast %3 : vector<1x96xf32> to vector<16x96xf32>
    %5 = arith.addf %2, %4 : vector<16x96xf32>
    %6 = vector.extract_strided_slice %5 {offsets = [0, 0], sizes = [16, 32], strides = [1, 1]} : vector<16x96xf32> to vector<16x32xf32>
    %7 = vector.extract_strided_slice %5 {offsets = [0, 32], sizes = [16, 32], strides = [1, 1]} : vector<16x96xf32> to vector<16x32xf32>
    %8 = vector.extract_strided_slice %5 {offsets = [0, 64], sizes = [16, 32], strides = [1, 1]} : vector<16x96xf32> to vector<16x32xf32>
    %9 = vector.shape_cast %6 : vector<16x32xf32> to vector<2x8x4x8xf32>
    %10 = tpu.transpose %9, [0, 2, 1, 3] : vector<2x8x4x8xf32> -> vector<2x4x8x8xf32>
    %11 = vector.shape_cast %10 : vector<2x4x8x8xf32> to vector<8x8x8xf32>
    %12 = vector.shape_cast %7 : vector<16x32xf32> to vector<2x8x4x8xf32>
    %13 = tpu.transpose %12, [0, 2, 1, 3] : vector<2x8x4x8xf32> -> vector<2x4x8x8xf32>
    %14 = vector.shape_cast %13 : vector<2x4x8x8xf32> to vector<8x8x8xf32>
    %15 = vector.shape_cast %8 : vector<16x32xf32> to vector<2x8x4x8xf32>
    %16 = tpu.transpose %15, [0, 2, 1, 3] : vector<2x8x4x8xf32> -> vector<2x4x8x8xf32>
    %17 = vector.shape_cast %16 : vector<2x4x8x8xf32> to vector<8x8x8xf32>
    "tpu.trace_start"() <{level = 10 : i32, message = "hqd,hkd->hqk"}> : () -> ()
    %cst_5 = arith.constant dense<0.000000e+00> : vector<8x8x8xf32>
    %18 = tpu.matmul %11, %14, %cst_5 {dimension_numbers = #tpu.dot_dimension_numbers<[2], [2], [1], [1], [0, 0, 0, 1, 1, 1], [0], [0]>} : vector<8x8x8xf32>, vector<8x8x8xf32>, vector<8x8x8xf32> -> vector<8x8x8xf32>
    "tpu.trace_stop"() : () -> ()
    %cst_6 = arith.constant dense<0xFF800000> : vector<8x8xf32>
    %19 = vector.multi_reduction <maximumf>, %18, %cst_6 [2] : vector<8x8x8xf32> to vector<8x8xf32>
    %20 = vector.shape_cast %19 : vector<8x8xf32> to vector<8x8x1xf32>
    %21 = vector.broadcast %20 : vector<8x8x1xf32> to vector<8x8x8xf32>
    %22 = arith.subf %18, %21 : vector<8x8x8xf32>
    %23 = math.exp %22 : vector<8x8x8xf32>
    %cst_7 = arith.constant dense<0.000000e+00> : vector<8x8xf32>
    %24 = vector.multi_reduction <add>, %23, %cst_7 [2] : vector<8x8x8xf32> to vector<8x8xf32>
    %25 = vector.shape_cast %24 : vector<8x8xf32> to vector<8x8x1xf32>
    %26 = tpu.reciprocal %25 : vector<8x8x1xf32> -> vector<8x8x1xf32>
    %27 = vector.broadcast %26 : vector<8x8x1xf32> to vector<8x8x8xf32>
    %28 = arith.mulf %23, %27 : vector<8x8x8xf32>
    "tpu.trace_start"() <{level = 10 : i32, message = "hqk,hkd->hqd"}> : () -> ()
    %cst_8 = arith.constant dense<0.000000e+00> : vector<8x8x8xf32>
    %29 = tpu.matmul %28, %17, %cst_8 {dimension_numbers = #tpu.dot_dimension_numbers<[2], [1], [1], [2], [0, 0, 0, 1, 1, 2], [0], [0]>} : vector<8x8x8xf32>, vector<8x8x8xf32>, vector<8x8x8xf32> -> vector<8x8x8xf32>
    "tpu.trace_stop"() : () -> ()
    %30 = vector.shape_cast %29 : vector<8x8x8xf32> to vector<2x4x8x8xf32>
    %31 = tpu.transpose %30, [0, 2, 1, 3] : vector<2x4x8x8xf32> -> vector<2x8x4x8xf32>
    %32 = vector.shape_cast %31 : vector<2x8x4x8xf32> to vector<16x32xf32>
    %c0_9 = arith.constant 0 : index
    %c0_10 = arith.constant 0 : index
    %33 = vector.load %arg3[%c0_9, %c0_10] : memref<32x32xf32, #tpu.memory_space<vmem>>, vector<32x32xf32>
    %cst_11 = arith.constant dense<0.000000e+00> : vector<16x32xf32>
    %34 = tpu.matmul %32, %33, %cst_11 {dimension_numbers = #tpu.dot_dimension_numbers<[1], [0], [0], [1], [0, 0, 1, 1], [], []>} : vector<16x32xf32>, vector<32x32xf32>, vector<16x32xf32> -> vector<16x32xf32>
    %c0_12 = arith.constant 0 : index
    %c0_13 = arith.constant 0 : index
    %35 = vector.load %arg4[%c0_12, %c0_13] : memref<1x32xf32, #tpu.memory_space<vmem>>, vector<1x32xf32>
    %36 = vector.broadcast %35 : vector<1x32xf32> to vector<16x32xf32>
    %37 = arith.addf %34, %36 : vector<16x32xf32>
    %c0_14 = arith.constant 0 : index
    %c0_15 = arith.constant 0 : index
    %38 = vector.load %arg5[%c0_14, %c0_15] : memref<16x32xf32, #tpu.memory_space<vmem>>, vector<16x32xf32>
    tpu.vector_store %arg5[%c0_14, %c0_15], %37 {strides = array<i32>} : memref<16x32xf32, #tpu.memory_space<vmem>>, vector<16x32xf32>,
    return
  }
}

</mosaic_0001>

<llo_original>
// kernel: tpu_custom_call.1
$region0: #{tpu_custom_call.1}
  #allocation0 [shape = 'u32[]', space=smem, size = 0x4, offset = 0x4, fixed_abs, tag = 'smem constant byte address 0x4 - core index']
  #allocation1 [shape = 'u32[144,128]{1,0:T(1,128)}', space=vmem, size = 0x12000, scoped, tag = 'internal scratch']
  %s0 = inlined_call_operand.hbm [shape: f32[16,32], index: 0, kind: input, shape index: {}]
  %s1 = inlined_call_operand.hbm [shape: f32[32,96], index: 1, kind: input, shape index: {}]
  %s2 = inlined_call_operand.vmem [shape: f32[1,96], index: 2, kind: input, shape index: {}]
  %s3 = inlined_call_operand.hbm [shape: f32[32,32], index: 3, kind: input, shape index: {}]
  %s4 = inlined_call_operand.vmem [shape: f32[1,32], index: 4, kind: input, shape index: {}]
  %s5 = inlined_call_operand.hbm [shape: f32[16,32], index: 5, kind: output, shape index: {}]
  %s6 = sld [smem:[#allocation0]]
  $region42: #{tpu_custom_call.1} parent=0
    _
  %s8 = ssub.s32 1, %s6
  %s9 = scalar_select 0, %s8, %s6
  $region1: #{tpu_custom_call.1} parent=0
    #allocation2 [shape = 'u8[8192]{0}', space=vmem, size = 0x2000, scoped, tag = 'input window, operand 0, single buffered']
    #allocation3 [shape = 's32[1]{0}', space=sflag, size = 0x4, scoped, tag = 'scoped memory for tpu_custom_call.1']
    #allocation4 [shape = 's32[1]{0}', space=sflag, size = 0x4, scoped, tag = 'scoped memory for tpu_custom_call.1']
    #allocation5 [shape = 'u8[16384]{0}', space=vmem, size = 0x4000, scoped, tag = 'input window, operand 1, single buffered']
    #allocation6 [shape = 's32[1]{0}', space=sflag, size = 0x4, scoped, tag = 'scoped memory for tpu_custom_call.1']
    #allocation7 [shape = 'u8[16384]{0}', space=vmem, size = 0x4000, scoped, tag = 'input window, operand 3, single buffered']
    #allocation8 [shape = 'u8[8192]{0}', space=vmem, size = 0x2000, scoped, tag = 'output window, operand 0, single buffered']
    %10 = vsyncpa [#allocation3], 0
    %11 = vsyncpa [#allocation6], 0
    %12 = vsyncpa [#allocation4], 0
    // Predicated region
    $region2: #{tpu_custom_call.1} parent=1 // pred_check
      _
    $region3: #{tpu_custom_call.1} parent=1 // pred_check_branch
      %14 = sbr.rel (0) target = $region5
    $region4: #{tpu_custom_call.1} parent=1 // pred_region
      %s16 = ssub.s32 256, 256
      %17 = vsyncadd [#allocation3], %s16
      %s18 = sshll.u32 [#allocation2], 4
      %s19 = int_to_ptr.vmem [resolvable:$true] %s18
      %24 = dma.hbm_to_vmem [thread:$0]  %s0, 256, %s19, [#allocation3], 128, 128, 8
    $region5: #{tpu_custom_call.1} parent=1 // pred_fallthru
      _
    // Predicated region
    $region6: #{tpu_custom_call.1} parent=1 // pred_check
      _
    $region7: #{tpu_custom_call.1} parent=1 // pred_check_branch
      %26 = sbr.rel (0) target = $region9
    $region8: #{tpu_custom_call.1} parent=1 // pred_region
      %s28 = ssub.s32 512, 512
      %29 = vsyncadd [#allocation6], %s28
      %s30 = sshll.u32 [#allocation5], 4
      %s31 = int_to_ptr.vmem [resolvable:$true] %s30
      %36 = dma.hbm_to_vmem [thread:$0]  %s1, 512, %s31, [#allocation6], 128, 128, 8
    $region9: #{tpu_custom_call.1} parent=1 // pred_fallthru
      _
    // Predicated region
    $region10: #{tpu_custom_call.1} parent=1 // pred_check
      _
    $region11: #{tpu_custom_call.1} parent=1 // pred_check_branch
      %38 = sbr.rel (0) target = $region13
    $region12: #{tpu_custom_call.1} parent=1 // pred_region
      _
    $region13: #{tpu_custom_call.1} parent=1 // pred_fallthru
      _
    // Predicated region
    $region14: #{tpu_custom_call.1} parent=1 // pred_check
      _
    $region15: #{tpu_custom_call.1} parent=1 // pred_check_branch
      %40 = sbr.rel (0) target = $region17
    $region16: #{tpu_custom_call.1} parent=1 // pred_region
      %s42 = ssub.s32 512, 512
      %43 = vsyncadd [#allocation6], %s42
      %s44 = sshll.u32 [#allocation7], 4
      %s45 = int_to_ptr.vmem [resolvable:$true] %s44
      %50 = dma.hbm_to_vmem [thread:$0]  %s3, 512, %s45, [#allocation6], 128, 128, 8
    $region17: #{tpu_custom_call.1} parent=1 // pred_fallthru
      _
    // Predicated region
    $region18: #{tpu_custom_call.1} parent=1 // pred_check
      _
    $region19: #{tpu_custom_call.1} parent=1 // pred_check_branch
      %52 = sbr.rel (0) target = $region21
    $region20: #{tpu_custom_call.1} parent=1 // pred_region
      _
    $region21: #{tpu_custom_call.1} parent=1 // pred_fallthru
      _
    // Predicated region
    $region22: #{tpu_custom_call.1} parent=1 // pred_check
      _
    $region23: #{tpu_custom_call.1} parent=1 // pred_check_branch
      %54 = sbr.rel (0) target = $region25
    $region24: #{tpu_custom_call.1} parent=1 // pred_region
      %55 = dma.done [#allocation3], 256
    $region25: #{tpu_custom_call.1} parent=1 // pred_fallthru
      _
    // Predicated region
    $region26: #{tpu_custom_call.1} parent=1 // pred_check
      _
    $region27: #{tpu_custom_call.1} parent=1 // pred_check_branch
      %57 = sbr.rel (0) target = $region29
    $region28: #{tpu_custom_call.1} parent=1 // pred_region
      %58 = dma.done [#allocation6], 512
    $region29: #{tpu_custom_call.1} parent=1 // pred_fallthru
      _
    // Predicated region
    $region30: #{tpu_custom_call.1} parent=1 // pred_check
      _
    $region31: #{tpu_custom_call.1} parent=1 // pred_check_branch
      %60 = sbr.rel (0) target = $region33
    $region32: #{tpu_custom_call.1} parent=1 // pred_region
      %61 = dma.done [#allocation6], 512
    $region33: #{tpu_custom_call.1} parent=1 // pred_fallthru
      _
    %v62 = vld [vmem:[#allocation2] sm:$0xff]
    %v63 = vld [vmem:[#allocation2 + $0x8] sm:$0xff]
    %v64 = vld [vmem:[#allocation5] sm:$0xff]
    %v65 = vld [vmem:[#allocation5 + $0x8] sm:$0xff]
    %v66 = vld [vmem:[#allocation5 + $0x10] sm:$0xff]
    %v67 = vld [vmem:[#allocation5 + $0x18] sm:$0xff]
    %v68 = vld [vmem:[%s2] sm:$0x1]
    %v70 = vlaneseq
    %v71 = vshrl.u32 %v70, 7
    %v72 = vsub.s32 0, %v71
    %v73 = vrot.slane %v68, %v72
    %vm75 = vcmask 261120
    %v77 = vsel %vm75, %v62, 0
    %v80 = vsel %vm75, %v63, 0
    %82 = vmatprep.subr.mxu0 0.0
    %83 = vmatpush1.msra.mxu0 %v64
    %84 = vmatprep.subr.mxu0 0.0
    %85 = vmatpush1.msra.mxu0 %v65
    %86 = vmatprep.subr.mxu0 0.0
    %87 = vmatpush1.msra.mxu0 %v66
    %88 = vmatprep.subr.mxu0 0.0
    %89 = vmatpush1.msra.mxu0 %v67
    %90 = vmatprep.subr.mxu0 0.0
    %91 = vmatpush1.msra.mxu0 0.0
    %92 = vmatprep.subr.mxu0 0.0
    %93 = vmatpush1.msra.mxu0 0.0
    %94 = vmatprep.subr.mxu0 0.0
    %95 = vmatpush1.msra.mxu0 0.0
    %96 = vmatprep.subr.mxu0 0.0
    %97 = vmatpush1.msra.mxu0 0.0
    %98 = vmatprep.subr.mxu0 0.0
    %99 = vmatpush1.msra.mxu0 0.0
    %100 = vmatprep.subr.mxu0 0.0
    %101 = vmatpush1.msra.mxu0 0.0
    %102 = vmatprep.subr.mxu0 0.0
    %103 = vmatpush1.msra.mxu0 0.0
    %104 = vmatprep.subr.mxu0 0.0
    %105 = vmatpush1.msra.mxu0 0.0
    %106 = vmatprep.subr.mxu0 0.0
    %107 = vmatpush1.msra.mxu0 0.0
    %108 = vmatprep.subr.mxu0 0.0
    %109 = vmatpush1.msra.mxu0 0.0
    %110 = vmatprep.subr.mxu0 0.0
    %111 = vmatpush1.msra.mxu0 0.0
    %112 = vmatprep.subr.mxu0 0.0
    %113 = vmatpush1.msra.mxu0 0.0
    %114 = vmatprep.subr.mxu0 0.0
    %115 = vmatpush1.msra.mxu0 0.0
    %116 = vmatprep.subr.mxu0 0.0
    %117 = vmatpush1.msra.mxu0 0.0
    %118 = vmatprep.subr.mxu0 0.0
    %119 = vmatpush1.msra.mxu0 0.0
    %120 = vmatprep.subr.mxu0 0.0
    %121 = vmatpush1.msra.mxu0 0.0
    %122 = vmatprep.subr.mxu0 0.0
    %123 = vmatpush1.msra.mxu0 0.0
    %124 = vmatprep.subr.mxu0 0.0
    %125 = vmatpush1.msra.mxu0 0.0
    %126 = vmatprep.subr.mxu0 0.0
    %127 = vmatpush1.msra.mxu0 0.0
    %128 = vmatprep.subr.mxu0 0.0
    %129 = vmatpush1.msra.mxu0 0.0
    %130 = vmatprep.subr.mxu0 0.0
    %131 = vmatpush1.msra.mxu0 0.0
    %132 = vmatprep.subr.mxu0 0.0
    %133 = vmatpush1.msra.mxu0 0.0
    %134 = vmatprep.subr.mxu0 0.0
    %135 = vmatpush1.msra.mxu0 0.0
    %136 = vmatprep.subr.mxu0 0.0
    %137 = vmatpush1.msra.mxu0 0.0
    %138 = vmatprep.subr.mxu0 0.0
    %139 = vmatpush1.msra.mxu0 0.0
    %140 = vmatprep.subr.mxu0 0.0
    %141 = vmatpush1.msra.mxu0 0.0
    %142 = vmatprep.subr.mxu0 0.0
    %143 = vmatpush1.msra.mxu0 0.0
    %144 = vmatprep.subr.mxu0 0.0
    %145 = vmatpush1.msra.mxu0 0.0
    %146 = vmatprep.mubr.f32.mxu0 0.0
    %147 = vmatmul.mubr.f32.gmra.mrb[0].mxu0 %v77
    %v148 = vpop.f32.mrb[0].mxu0
    %v149 = vadd.f32 %v73, %v148
    %v150 = vpop.f32.mrb[0].mxu0
    %151 = vmatprep.mubr.f32.mxu0 0.0
    %152 = vmatmul.mubr.f32.gmra.mrb[0].mxu0 %v80
    %v153 = vpop.f32.mrb[0].mxu0
    %v154 = vadd.f32 %v73, %v153
    %v155 = vpop.f32.mrb[0].mxu0
    %156 = vdwg.mxu0
    %159 = vrot.lane.b32.xlu0 %v149, 120
    %v160 = vpop.permute.xlu0 %159
    %161 = vrot.lane.b32.xlu0 %v154, 120
    %v162 = vpop.permute.xlu0 %161
    %165 = vrot.lane.b32.xlu0 %v149, 112
    %v166 = vpop.permute.xlu0 %165
    %167 = vrot.lane.b32.xlu0 %v154, 112
    %v168 = vpop.permute.xlu0 %167
    %171 = vrot.lane.b32.xlu0 %v149, 104
    %v172 = vpop.permute.xlu0 %171
    %173 = vrot.lane.b32.xlu0 %v154, 104
    %v174 = vpop.permute.xlu0 %173
    %v177 = vcombine.low %v149, %v166
    %v178 = vcombine.high %v149, %v166
    %v180 = vunpack.c.l.s4 1983009808
    %v181 = vunpack.c.0.s8 %v180
    %v182 = vlaneseq
    %v183 = vshrl.u32 %v182, 7
    %v184 = vsub.s32 %v181, %v183
    %v185 = vrot.slane %v177, %v184
    %v187 = vunpack.c.l.s4 1983009808
    %v188 = vunpack.c.0.s8 %v187
    %v189 = vlaneseq
    %v190 = vshrl.u32 %v189, 7
    %v191 = vsub.s32 %v188, %v190
    %v192 = vrot.slane %v178, %v191
    %v193 = vcombine.low %v160, %v172
    %v194 = vcombine.high %v160, %v172
    %v196 = vunpack.c.l.s4 1983009808
    %v197 = vunpack.c.0.s8 %v196
    %v198 = vlaneseq
    %v199 = vshrl.u32 %v198, 7
    %v200 = vsub.s32 %v197, %v199
    %v201 = vrot.slane %v193, %v200
    %v203 = vunpack.c.l.s4 1983009808
    %v204 = vunpack.c.0.s8 %v203
    %v205 = vlaneseq
    %v206 = vshrl.u32 %v205, 7
    %v207 = vsub.s32 %v204, %v206
    %v208 = vrot.slane %v194, %v207
    %v209 = vcombine.low %v185, %v201
    %v210 = vcombine.high %v185, %v201
    %v212 = vunpack.c.l.s4 1934713408
    %v213 = vunpack.c.0.s8 %v212
    %v214 = vlaneseq
    %v215 = vshrl.u32 %v214, 7
    %v216 = vsub.s32 %v213, %v215
    %v217 = vrot.slane %v209, %v216
    %v219 = vunpack.c.l.s4 1934713408
    %v220 = vunpack.c.0.s8 %v219
    %v221 = vlaneseq
    %v222 = vshrl.u32 %v221, 7
    %v223 = vsub.s32 %v220, %v222
    %v224 = vrot.slane %v210, %v223
    %v225 = vcombine.low %v192, %v208
    %v226 = vcombine.high %v192, %v208
    %v228 = vunpack.c.l.s4 1934713408
    %v229 = vunpack.c.0.s8 %v228
    %v230 = vlaneseq
    %v231 = vshrl.u32 %v230, 7
    %v232 = vsub.s32 %v229, %v231
    %v233 = vrot.slane %v225, %v232
    %v235 = vunpack.c.l.s4 1934713408
    %v236 = vunpack.c.0.s8 %v235
    %v237 = vlaneseq
    %v238 = vshrl.u32 %v237, 7
    %v239 = vsub.s32 %v236, %v238
    %v240 = vrot.slane %v226, %v239
    %v241 = vcombine.high %v217, 0.0
    %v242 = vcombine.high %v224, 0.0
    %v243 = vcombine.high %v233, 0.0
    %v244 = vcombine.high %v240, 0.0
    %v245 = vcombine.low %v154, %v168
    %v246 = vcombine.high %v154, %v168
    %v248 = vunpack.c.l.s4 1983009808
    %v249 = vunpack.c.0.s8 %v248
    %v250 = vlaneseq
    %v251 = vshrl.u32 %v250, 7
    %v252 = vsub.s32 %v249, %v251
    %v253 = vrot.slane %v245, %v252
    %v255 = vunpack.c.l.s4 1983009808
    %v256 = vunpack.c.0.s8 %v255
    %v257 = vlaneseq
    %v258 = vshrl.u32 %v257, 7
    %v259 = vsub.s32 %v256, %v258
    %v260 = vrot.slane %v246, %v259
    %v261 = vcombine.low %v162, %v174
    %v262 = vcombine.high %v162, %v174
    %v264 = vunpack.c.l.s4 1983009808
    %v265 = vunpack.c.0.s8 %v264
    %v266 = vlaneseq
    %v267 = vshrl.u32 %v266, 7
    %v268 = vsub.s32 %v265, %v267
    %v269 = vrot.slane %v261, %v268
    %v271 = vunpack.c.l.s4 1983009808
    %v272 = vunpack.c.0.s8 %v271
    %v273 = vlaneseq
    %v274 = vshrl.u32 %v273, 7
    %v275 = vsub.s32 %v272, %v274
    %v276 = vrot.slane %v262, %v275
    %v277 = vcombine.low %v253, %v269
    %v278 = vcombine.high %v253, %v269
    %v280 = vunpack.c.l.s4 1934713408
    %v281 = vunpack.c.0.s8 %v280
    %v282 = vlaneseq
    %v283 = vshrl.u32 %v282, 7
    %v284 = vsub.s32 %v281, %v283
    %v285 = vrot.slane %v277, %v284
    %v287 = vunpack.c.l.s4 1934713408
    %v288 = vunpack.c.0.s8 %v287
    %v289 = vlaneseq
    %v290 = vshrl.u32 %v289, 7
    %v291 = vsub.s32 %v288, %v290
    %v292 = vrot.slane %v278, %v291
    %v293 = vcombine.low %v260, %v276
    %v294 = vcombine.high %v260, %v276
    %v296 = vunpack.c.l.s4 1934713408
    %v297 = vunpack.c.0.s8 %v296
    %v298 = vlaneseq
    %v299 = vshrl.u32 %v298, 7
    %v300 = vsub.s32 %v297, %v299
    %v301 = vrot.slane %v293, %v300
    %v303 = vunpack.c.l.s4 1934713408
    %v304 = vunpack.c.0.s8 %v303
    %v305 = vlaneseq
    %v306 = vshrl.u32 %v305, 7
    %v307 = vsub.s32 %v304, %v306
    %v308 = vrot.slane %v294, %v307
    %v309 = vcombine.high %v285, 0.0
    %v310 = vcombine.high %v292, 0.0
    %v311 = vcombine.high %v301, 0.0
    %v312 = vcombine.high %v308, 0.0
    %v313 = vcombine.low %v217, %v224
    %v315 = vunpack.c.l.s4 1983009808
    %v316 = vunpack.c.0.s8 %v315
    %v317 = vlaneseq
    %v318 = vshrl.u32 %v317, 7
    %v319 = vsub.s32 %v316, %v318
    %v320 = vrot.slane %v313, %v319
    %v321 = vcombine.low %v241, %v242
    %v323 = vunpack.c.l.s4 1983009808
    %v324 = vunpack.c.0.s8 %v323
    %v325 = vlaneseq
    %v326 = vshrl.u32 %v325, 7
    %v327 = vsub.s32 %v324, %v326
    %v328 = vrot.slane %v321, %v327
    %v329 = vcombine.low %v233, %v240
    %v331 = vunpack.c.l.s4 1983009808
    %v332 = vunpack.c.0.s8 %v331
    %v333 = vlaneseq
    %v334 = vshrl.u32 %v333, 7
    %v335 = vsub.s32 %v332, %v334
    %v336 = vrot.slane %v329, %v335
    %v337 = vcombine.low %v243, %v244
    %v339 = vunpack.c.l.s4 1983009808
    %v340 = vunpack.c.0.s8 %v339
    %v341 = vlaneseq
    %v342 = vshrl.u32 %v341, 7
    %v343 = vsub.s32 %v340, %v342
    %v344 = vrot.slane %v337, %v343
    %v345 = vcombine.low %v320, %v328
    %v346 = vcombine.high %v320, %v328
    %v348 = vunpack.c.l.s4 1934713408
    %v349 = vunpack.c.0.s8 %v348
    %v350 = vlaneseq
    %v351 = vshrl.u32 %v350, 7
    %v352 = vsub.s32 %v349, %v351
    %v353 = vrot.slane %v345, %v352
    %v355 = vunpack.c.l.s4 1934713408
    %v356 = vunpack.c.0.s8 %v355
    %v357 = vlaneseq
    %v358 = vshrl.u32 %v357, 7
    %v359 = vsub.s32 %v356, %v358
    %v360 = vrot.slane %v346, %v359
    %v361 = vcombine.low %v336, %v344
    %v362 = vcombine.high %v336, %v344
    %v364 = vunpack.c.l.s4 1934713408
    %v365 = vunpack.c.0.s8 %v364
    %v366 = vlaneseq
    %v367 = vshrl.u32 %v366, 7
    %v368 = vsub.s32 %v365, %v367
    %v369 = vrot.slane %v361, %v368
    %v371 = vunpack.c.l.s4 1934713408
    %v372 = vunpack.c.0.s8 %v371
    %v373 = vlaneseq
    %v374 = vshrl.u32 %v373, 7
    %v375 = vsub.s32 %v372, %v374
    %v376 = vrot.slane %v362, %v375
    %v377 = vcombine.low %v353, %v369
    %v378 = vcombine.high %v353, %v369
    %v379 = vcombine.low %v360, %v376
    %v380 = vcombine.high %v360, %v376
    %v381 = vcombine.low %v285, %v292
    %v383 = vunpack.c.l.s4 1983009808
    %v384 = vunpack.c.0.s8 %v383
    %v385 = vlaneseq
    %v386 = vshrl.u32 %v385, 7
    %v387 = vsub.s32 %v384, %v386
    %v388 = vrot.slane %v381, %v387
    %v389 = vcombine.low %v309, %v310
    %v391 = vunpack.c.l.s4 1983009808
    %v392 = vunpack.c.0.s8 %v391
    %v393 = vlaneseq
    %v394 = vshrl.u32 %v393, 7
    %v395 = vsub.s32 %v392, %v394
    %v396 = vrot.slane %v389, %v395
    %v397 = vcombine.low %v301, %v308
    %v399 = vunpack.c.l.s4 1983009808
    %v400 = vunpack.c.0.s8 %v399
    %v401 = vlaneseq
    %v402 = vshrl.u32 %v401, 7
    %v403 = vsub.s32 %v400, %v402
    %v404 = vrot.slane %v397, %v403
    %v405 = vcombine.low %v311, %v312
    %v407 = vunpack.c.l.s4 1983009808
    %v408 = vunpack.c.0.s8 %v407
    %v409 = vlaneseq
    %v410 = vshrl.u32 %v409, 7
    %v411 = vsub.s32 %v408, %v410
    %v412 = vrot.slane %v405, %v411
    %v413 = vcombine.low %v388, %v396
    %v414 = vcombine.high %v388, %v396
    %v416 = vunpack.c.l.s4 1934713408
    %v417 = vunpack.c.0.s8 %v416
    %v418 = vlaneseq
    %v419 = vshrl.u32 %v418, 7
    %v420 = vsub.s32 %v417, %v419
    %v421 = vrot.slane %v413, %v420
    %v423 = vunpack.c.l.s4 1934713408
    %v424 = vunpack.c.0.s8 %v423
    %v425 = vlaneseq
    %v426 = vshrl.u32 %v425, 7
    %v427 = vsub.s32 %v424, %v426
    %v428 = vrot.slane %v414, %v427
    %v429 = vcombine.low %v404, %v412
    %v430 = vcombine.high %v404, %v412
    %v432 = vunpack.c.l.s4 1934713408
    %v433 = vunpack.c.0.s8 %v432
    %v434 = vlaneseq
    %v435 = vshrl.u32 %v434, 7
    %v436 = vsub.s32 %v433, %v435
    %v437 = vrot.slane %v429, %v436
    %v439 = vunpack.c.l.s4 1934713408
    %v440 = vunpack.c.0.s8 %v439
    %v441 = vlaneseq
    %v442 = vshrl.u32 %v441, 7
    %v443 = vsub.s32 %v440, %v442
    %v444 = vrot.slane %v430, %v443
    %v445 = vcombine.low %v421, %v437
    %v446 = vcombine.high %v421, %v437
    %v447 = vcombine.low %v428, %v444
    %v448 = vcombine.high %v428, %v444
    %449 = vrot.lane.b32.xlu0 %v149, 96
    %v450 = vpop.permute.xlu0 %449
    %451 = vrot.lane.b32.xlu0 %v154, 96
    %v452 = vpop.permute.xlu0 %451
    %453 = vrot.lane.b32.xlu0 %v160, 96
    %v454 = vpop.permute.xlu0 %453
    %455 = vrot.lane.b32.xlu0 %v162, 96
    %v456 = vpop.permute.xlu0 %455
    %457 = vrot.lane.b32.xlu0 %v166, 96
    %v458 = vpop.permute.xlu0 %457
    %459 = vrot.lane.b32.xlu0 %v168, 96
    %v460 = vpop.permute.xlu0 %459
    %461 = vrot.lane.b32.xlu0 %v172, 96
    %v462 = vpop.permute.xlu0 %461
    %463 = vrot.lane.b32.xlu0 %v174, 96
    %v464 = vpop.permute.xlu0 %463
    %v473 = vcombine.low %v450, %v458
    %v474 = vcombine.high %v450, %v458
    %v476 = vunpack.c.l.s4 1983009808
    %v477 = vunpack.c.0.s8 %v476
    %v478 = vlaneseq
    %v479 = vshrl.u32 %v478, 7
    %v480 = vsub.s32 %v477, %v479
    %v481 = vrot.slane %v473, %v480
    %v483 = vunpack.c.l.s4 1983009808
    %v484 = vunpack.c.0.s8 %v483
    %v485 = vlaneseq
    %v486 = vshrl.u32 %v485, 7
    %v487 = vsub.s32 %v484, %v486
    %v488 = vrot.slane %v474, %v487
    %v489 = vcombine.low %v454, %v462
    %v490 = vcombine.high %v454, %v462
    %v492 = vunpack.c.l.s4 1983009808
    %v493 = vunpack.c.0.s8 %v492
    %v494 = vlaneseq
    %v495 = vshrl.u32 %v494, 7
    %v496 = vsub.s32 %v493, %v495
    %v497 = vrot.slane %v489, %v496
    %v499 = vunpack.c.l.s4 1983009808
    %v500 = vunpack.c.0.s8 %v499
    %v501 = vlaneseq
    %v502 = vshrl.u32 %v501, 7
    %v503 = vsub.s32 %v500, %v502
    %v504 = vrot.slane %v490, %v503
    %v505 = vcombine.low %v481, %v497
    %v506 = vcombine.high %v481, %v497
    %v508 = vunpack.c.l.s4 1934713408
    %v509 = vunpack.c.0.s8 %v508
    %v510 = vlaneseq
    %v511 = vshrl.u32 %v510, 7
    %v512 = vsub.s32 %v509, %v511
    %v513 = vrot.slane %v505, %v512
    %v515 = vunpack.c.l.s4 1934713408
    %v516 = vunpack.c.0.s8 %v515
    %v517 = vlaneseq
    %v518 = vshrl.u32 %v517, 7
    %v519 = vsub.s32 %v516, %v518
    %v520 = vrot.slane %v506, %v519
    %v521 = vcombine.low %v488, %v504
    %v522 = vcombine.high %v488, %v504
    %v524 = vunpack.c.l.s4 1934713408
    %v525 = vunpack.c.0.s8 %v524
    %v526 = vlaneseq
    %v527 = vshrl.u32 %v526, 7
    %v528 = vsub.s32 %v525, %v527
    %v529 = vrot.slane %v521, %v528
    %v531 = vunpack.c.l.s4 1934713408
    %v532 = vunpack.c.0.s8 %v531
    %v533 = vlaneseq
    %v534 = vshrl.u32 %v533, 7
    %v535 = vsub.s32 %v532, %v534
    %v536 = vrot.slane %v522, %v535
    %v537 = vcombine.high %v513, 0.0
    %v538 = vcombine.high %v520, 0.0
    %v539 = vcombine.high %v529, 0.0
    %v540 = vcombine.high %v536, 0.0
    %v541 = vcombine.low %v452, %v460
    %v542 = vcombine.high %v452, %v460
    %v544 = vunpack.c.l.s4 1983009808
    %v545 = vunpack.c.0.s8 %v544
    %v546 = vlaneseq
    %v547 = vshrl.u32 %v546, 7
    %v548 = vsub.s32 %v545, %v547
    %v549 = vrot.slane %v541, %v548
    %v551 = vunpack.c.l.s4 1983009808
    %v552 = vunpack.c.0.s8 %v551
    %v553 = vlaneseq
    %v554 = vshrl.u32 %v553, 7
    %v555 = vsub.s32 %v552, %v554
    %v556 = vrot.slane %v542, %v555
    %v557 = vcombine.low %v456, %v464
    %v558 = vcombine.high %v456, %v464
    %v560 = vunpack.c.l.s4 1983009808
    %v561 = vunpack.c.0.s8 %v560
    %v562 = vlaneseq
    %v563 = vshrl.u32 %v562, 7
    %v564 = vsub.s32 %v561, %v563
    %v565 = vrot.slane %v557, %v564
    %v567 = vunpack.c.l.s4 1983009808
    %v568 = vunpack.c.0.s8 %v567
    %v569 = vlaneseq
    %v570 = vshrl.u32 %v569, 7
    %v571 = vsub.s32 %v568, %v570
    %v572 = vrot.slane %v558, %v571
    %v573 = vcombine.low %v549, %v565
    %v574 = vcombine.high %v549, %v565
    %v576 = vunpack.c.l.s4 1934713408
    %v577 = vunpack.c.0.s8 %v576
    %v578 = vlaneseq
    %v579 = vshrl.u32 %v578, 7
    %v580 = vsub.s32 %v577, %v579
    %v581 = vrot.slane %v573, %v580
    %v583 = vunpack.c.l.s4 1934713408
    %v584 = vunpack.c.0.s8 %v583
    %v585 = vlaneseq
    %v586 = vshrl.u32 %v585, 7
    %v587 = vsub.s32 %v584, %v586
    %v588 = vrot.slane %v574, %v587
    %v589 = vcombine.low %v556, %v572
    %v590 = vcombine.high %v556, %v572
    %v592 = vunpack.c.l.s4 1934713408
    %v593 = vunpack.c.0.s8 %v592
    %v594 = vlaneseq
    %v595 = vshrl.u32 %v594, 7
    %v596 = vsub.s32 %v593, %v595
    %v597 = vrot.slane %v589, %v596
    %v599 = vunpack.c.l.s4 1934713408
    %v600 = vunpack.c.0.s8 %v599
    %v601 = vlaneseq
    %v602 = vshrl.u32 %v601, 7
    %v603 = vsub.s32 %v600, %v602
    %v604 = vrot.slane %v590, %v603
    %v605 = vcombine.high %v581, 0.0
    %v606 = vcombine.high %v588, 0.0
    %v607 = vcombine.high %v597, 0.0
    %v608 = vcombine.high %v604, 0.0
    %v609 = vcombine.low %v513, %v520
    %v611 = vunpack.c.l.s4 1983009808
    %v612 = vunpack.c.0.s8 %v611
    %v613 = vlaneseq
    %v614 = vshrl.u32 %v613, 7
    %v615 = vsub.s32 %v612, %v614
    %v616 = vrot.slane %v609, %v615
    %v617 = vcombine.low %v537, %v538
    %v619 = vunpack.c.l.s4 1983009808
    %v620 = vunpack.c.0.s8 %v619
    %v621 = vlaneseq
    %v622 = vshrl.u32 %v621, 7
    %v623 = vsub.s32 %v620, %v622
    %v624 = vrot.slane %v617, %v623
    %v625 = vcombine.low %v529, %v536
    %v627 = vunpack.c.l.s4 1983009808
    %v628 = vunpack.c.0.s8 %v627
    %v629 = vlaneseq
    %v630 = vshrl.u32 %v629, 7
    %v631 = vsub.s32 %v628, %v630
    %v632 = vrot.slane %v625, %v631
    %v633 = vcombine.low %v539, %v540
    %v635 = vunpack.c.l.s4 1983009808
    %v636 = vunpack.c.0.s8 %v635
    %v637 = vlaneseq
    %v638 = vshrl.u32 %v637, 7
    %v639 = vsub.s32 %v636, %v638
    %v640 = vrot.slane %v633, %v639
    %v641 = vcombine.low %v616, %v624
    %v642 = vcombine.high %v616, %v624
    %v644 = vunpack.c.l.s4 1934713408
    %v645 = vunpack.c.0.s8 %v644
    %v646 = vlaneseq
    %v647 = vshrl.u32 %v646, 7
    %v648 = vsub.s32 %v645, %v647
    %v649 = vrot.slane %v641, %v648
    %v651 = vunpack.c.l.s4 1934713408
    %v652 = vunpack.c.0.s8 %v651
    %v653 = vlaneseq
    %v654 = vshrl.u32 %v653, 7
    %v655 = vsub.s32 %v652, %v654
    %v656 = vrot.slane %v642, %v655
    %v657 = vcombine.low %v632, %v640
    %v658 = vcombine.high %v632, %v640
    %v660 = vunpack.c.l.s4 1934713408
    %v661 = vunpack.c.0.s8 %v660
    %v662 = vlaneseq
    %v663 = vshrl.u32 %v662, 7
    %v664 = vsub.s32 %v661, %v663
    %v665 = vrot.slane %v657, %v664
    %v667 = vunpack.c.l.s4 1934713408
    %v668 = vunpack.c.0.s8 %v667
    %v669 = vlaneseq
    %v670 = vshrl.u32 %v669, 7
    %v671 = vsub.s32 %v668, %v670
    %v672 = vrot.slane %v658, %v671
    %v673 = vcombine.low %v649, %v665
    %v674 = vcombine.high %v649, %v665
    %v675 = vcombine.low %v656, %v672
    %v676 = vcombine.high %v656, %v672
    %v677 = vcombine.low %v581, %v588
    %v679 = vunpack.c.l.s4 1983009808
    %v680 = vunpack.c.0.s8 %v679
    %v681 = vlaneseq
    %v682 = vshrl.u32 %v681, 7
    %v683 = vsub.s32 %v680, %v682
    %v684 = vrot.slane %v677, %v683
    %v685 = vcombine.low %v605, %v606
    %v687 = vunpack.c.l.s4 1983009808
    %v688 = vunpack.c.0.s8 %v687
    %v689 = vlaneseq
    %v690 = vshrl.u32 %v689, 7
    %v691 = vsub.s32 %v688, %v690
    %v692 = vrot.slane %v685, %v691
    %v693 = vcombine.low %v597, %v604
    %v695 = vunpack.c.l.s4 1983009808
    %v696 = vunpack.c.0.s8 %v695
    %v697 = vlaneseq
    %v698 = vshrl.u32 %v697, 7
    %v699 = vsub.s32 %v696, %v698
    %v700 = vrot.slane %v693, %v699
    %v701 = vcombine.low %v607, %v608
    %v703 = vunpack.c.l.s4 1983009808
    %v704 = vunpack.c.0.s8 %v703
    %v705 = vlaneseq
    %v706 = vshrl.u32 %v705, 7
    %v707 = vsub.s32 %v704, %v706
    %v708 = vrot.slane %v701, %v707
    %v709 = vcombine.low %v684, %v692
    %v710 = vcombine.high %v684, %v692
    %v712 = vunpack.c.l.s4 1934713408
    %v713 = vunpack.c.0.s8 %v712
    %v714 = vlaneseq
    %v715 = vshrl.u32 %v714, 7
    %v716 = vsub.s32 %v713, %v715
    %v717 = vrot.slane %v709, %v716
    %v719 = vunpack.c.l.s4 1934713408
    %v720 = vunpack.c.0.s8 %v719
    %v721 = vlaneseq
    %v722 = vshrl.u32 %v721, 7
    %v723 = vsub.s32 %v720, %v722
    %v724 = vrot.slane %v710, %v723
    %v725 = vcombine.low %v700, %v708
    %v726 = vcombine.high %v700, %v708
    %v728 = vunpack.c.l.s4 1934713408
    %v729 = vunpack.c.0.s8 %v728
    %v730 = vlaneseq
    %v731 = vshrl.u32 %v730, 7
    %v732 = vsub.s32 %v729, %v731
    %v733 = vrot.slane %v725, %v732
    %v735 = vunpack.c.l.s4 1934713408
    %v736 = vunpack.c.0.s8 %v735
    %v737 = vlaneseq
    %v738 = vshrl.u32 %v737, 7
    %v739 = vsub.s32 %v736, %v738
    %v740 = vrot.slane %v726, %v739
    %v741 = vcombine.low %v717, %v733
    %v742 = vcombine.high %v717, %v733
    %v743 = vcombine.low %v724, %v740
    %v744 = vcombine.high %v724, %v740
    %745 = vrot.lane.b32.xlu0 %v149, 64
    %v746 = vpop.permute.xlu0 %745
    %747 = vrot.lane.b32.xlu0 %v154, 64
    %v748 = vpop.permute.xlu0 %747
    %749 = vrot.lane.b32.xlu0 %v160, 64
    %v750 = vpop.permute.xlu0 %749
    %751 = vrot.lane.b32.xlu0 %v162, 64
    %v752 = vpop.permute.xlu0 %751
    %753 = vrot.lane.b32.xlu0 %v166, 64
    %v754 = vpop.permute.xlu0 %753
    %755 = vrot.lane.b32.xlu0 %v168, 64
    %v756 = vpop.permute.xlu0 %755
    %757 = vrot.lane.b32.xlu0 %v172, 64
    %v758 = vpop.permute.xlu0 %757
    %759 = vrot.lane.b32.xlu0 %v174, 64
    %v760 = vpop.permute.xlu0 %759
    %v769 = vcombine.low %v746, %v754
    %v770 = vcombine.high %v746, %v754
    %v772 = vunpack.c.l.s4 1983009808
    %v773 = vunpack.c.0.s8 %v772
    %v774 = vlaneseq
    %v775 = vshrl.u32 %v774, 7
    %v776 = vsub.s32 %v773, %v775
    %v777 = vrot.slane %v769, %v776
    %v779 = vunpack.c.l.s4 1983009808
    %v780 = vunpack.c.0.s8 %v779
    %v781 = vlaneseq
    %v782 = vshrl.u32 %v781, 7
    %v783 = vsub.s32 %v780, %v782
    %v784 = vrot.slane %v770, %v783
    %v785 = vcombine.low %v750, %v758
    %v786 = vcombine.high %v750, %v758
    %v788 = vunpack.c.l.s4 1983009808
    %v789 = vunpack.c.0.s8 %v788
    %v790 = vlaneseq
    %v791 = vshrl.u32 %v790, 7
    %v792 = vsub.s32 %v789, %v791
    %v793 = vrot.slane %v785, %v792
    %v795 = vunpack.c.l.s4 1983009808
    %v796 = vunpack.c.0.s8 %v795
    %v797 = vlaneseq
    %v798 = vshrl.u32 %v797, 7
    %v799 = vsub.s32 %v796, %v798
    %v800 = vrot.slane %v786, %v799
    %v801 = vcombine.low %v777, %v793
    %v802 = vcombine.high %v777, %v793
    %v804 = vunpack.c.l.s4 1934713408
    %v805 = vunpack.c.0.s8 %v804
    %v806 = vlaneseq
    %v807 = vshrl.u32 %v806, 7
    %v808 = vsub.s32 %v805, %v807
    %v809 = vrot.slane %v801, %v808
    %v811 = vunpack.c.l.s4 1934713408
    %v812 = vunpack.c.0.s8 %v811
    %v813 = vlaneseq
    %v814 = vshrl.u32 %v813, 7
    %v815 = vsub.s32 %v812, %v814
    %v816 = vrot.slane %v802, %v815
    %v817 = vcombine.low %v784, %v800
    %v818 = vcombine.high %v784, %v800
    %v820 = vunpack.c.l.s4 1934713408
    %v821 = vunpack.c.0.s8 %v820
    %v822 = vlaneseq
    %v823 = vshrl.u32 %v822, 7
    %v824 = vsub.s32 %v821, %v823
    %v825 = vrot.slane %v817, %v824
    %v827 = vunpack.c.l.s4 1934713408
    %v828 = vunpack.c.0.s8 %v827
    %v829 = vlaneseq
    %v830 = vshrl.u32 %v829, 7
    %v831 = vsub.s32 %v828, %v830
    %v832 = vrot.slane %v818, %v831
    %v833 = vcombine.high %v809, 0.0
    %v834 = vcombine.high %v816, 0.0
    %v835 = vcombine.high %v825, 0.0
    %v836 = vcombine.high %v832, 0.0
    %v837 = vcombine.low %v748, %v756
    %v838 = vcombine.high %v748, %v756
    %v840 = vunpack.c.l.s4 1983009808
    %v841 = vunpack.c.0.s8 %v840
    %v842 = vlaneseq
    %v843 = vshrl.u32 %v842, 7
    %v844 = vsub.s32 %v841, %v843
    %v845 = vrot.slane %v837, %v844
    %v847 = vunpack.c.l.s4 1983009808
    %v848 = vunpack.c.0.s8 %v847
    %v849 = vlaneseq
    %v850 = vshrl.u32 %v849, 7
    %v851 = vsub.s32 %v848, %v850
    %v852 = vrot.slane %v838, %v851
    %v853 = vcombine.low %v752, %v760
    %v854 = vcombine.high %v752, %v760
    %v856 = vunpack.c.l.s4 1983009808
    %v857 = vunpack.c.0.s8 %v856
    %v858 = vlaneseq
    %v859 = vshrl.u32 %v858, 7
    %v860 = vsub.s32 %v857, %v859
    %v861 = vrot.slane %v853, %v860
    %v863 = vunpack.c.l.s4 1983009808
    %v864 = vunpack.c.0.s8 %v863
    %v865 = vlaneseq
    %v866 = vshrl.u32 %v865, 7
    %v867 = vsub.s32 %v864, %v866
    %v868 = vrot.slane %v854, %v867
    %v869 = vcombine.low %v845, %v861
    %v870 = vcombine.high %v845, %v861
    %v872 = vunpack.c.l.s4 1934713408
    %v873 = vunpack.c.0.s8 %v872
    %v874 = vlaneseq
    %v875 = vshrl.u32 %v874, 7
    %v876 = vsub.s32 %v873, %v875
    %v877 = vrot.slane %v869, %v876
    %v879 = vunpack.c.l.s4 1934713408
    %v880 = vunpack.c.0.s8 %v879
    %v881 = vlaneseq
    %v882 = vshrl.u32 %v881, 7
    %v883 = vsub.s32 %v880, %v882
    %v884 = vrot.slane %v870, %v883
    %v885 = vcombine.low %v852, %v868
    %v886 = vcombine.high %v852, %v868
    %v888 = vunpack.c.l.s4 1934713408
    %v889 = vunpack.c.0.s8 %v888
    %v890 = vlaneseq
    %v891 = vshrl.u32 %v890, 7
    %v892 = vsub.s32 %v889, %v891
    %v893 = vrot.slane %v885, %v892
    %v895 = vunpack.c.l.s4 1934713408
    %v896 = vunpack.c.0.s8 %v895
    %v897 = vlaneseq
    %v898 = vshrl.u32 %v897, 7
    %v899 = vsub.s32 %v896, %v898
    %v900 = vrot.slane %v886, %v899
    %v901 = vcombine.high %v877, 0.0
    %v902 = vcombine.high %v884, 0.0
    %v903 = vcombine.high %v893, 0.0
    %v904 = vcombine.high %v900, 0.0
    %v905 = vcombine.low %v809, %v816
    %v907 = vunpack.c.l.s4 1983009808
    %v908 = vunpack.c.0.s8 %v907
    %v909 = vlaneseq
    %v910 = vshrl.u32 %v909, 7
    %v911 = vsub.s32 %v908, %v910
    %v912 = vrot.slane %v905, %v911
    %v913 = vcombine.low %v833, %v834
    %v915 = vunpack.c.l.s4 1983009808
    %v916 = vunpack.c.0.s8 %v915
    %v917 = vlaneseq
    %v918 = vshrl.u32 %v917, 7
    %v919 = vsub.s32 %v916, %v918
    %v920 = vrot.slane %v913, %v919
    %v921 = vcombine.low %v825, %v832
    %v923 = vunpack.c.l.s4 1983009808
    %v924 = vunpack.c.0.s8 %v923
    %v925 = vlaneseq
    %v926 = vshrl.u32 %v925, 7
    %v927 = vsub.s32 %v924, %v926
    %v928 = vrot.slane %v921, %v927
    %v929 = vcombine.low %v835, %v836
    %v931 = vunpack.c.l.s4 1983009808
    %v932 = vunpack.c.0.s8 %v931
    %v933 = vlaneseq
    %v934 = vshrl.u32 %v933, 7
    %v935 = vsub.s32 %v932, %v934
    %v936 = vrot.slane %v929, %v935
    %v937 = vcombine.low %v912, %v920
    %v938 = vcombine.high %v912, %v920
    %v940 = vunpack.c.l.s4 1934713408
    %v941 = vunpack.c.0.s8 %v940
    %v942 = vlaneseq
    %v943 = vshrl.u32 %v942, 7
    %v944 = vsub.s32 %v941, %v943
    %v945 = vrot.slane %v937, %v944
    %v947 = vunpack.c.l.s4 1934713408
    %v948 = vunpack.c.0.s8 %v947
    %v949 = vlaneseq
    %v950 = vshrl.u32 %v949, 7
    %v951 = vsub.s32 %v948, %v950
    %v952 = vrot.slane %v938, %v951
    %v953 = vcombine.low %v928, %v936
    %v954 = vcombine.high %v928, %v936
    %v956 = vunpack.c.l.s4 1934713408
    %v957 = vunpack.c.0.s8 %v956
    %v958 = vlaneseq
    %v959 = vshrl.u32 %v958, 7
    %v960 = vsub.s32 %v957, %v959
    %v961 = vrot.slane %v953, %v960
    %v963 = vunpack.c.l.s4 1934713408
    %v964 = vunpack.c.0.s8 %v963
    %v965 = vlaneseq
    %v966 = vshrl.u32 %v965, 7
    %v967 = vsub.s32 %v964, %v966
    %v968 = vrot.slane %v954, %v967
    %v969 = vcombine.low %v945, %v961
    %v970 = vcombine.high %v945, %v961
    %v971 = vcombine.low %v952, %v968
    %v972 = vcombine.high %v952, %v968
    %v973 = vcombine.low %v877, %v884
    %v975 = vunpack.c.l.s4 1983009808
    %v976 = vunpack.c.0.s8 %v975
    %v977 = vlaneseq
    %v978 = vshrl.u32 %v977, 7
    %v979 = vsub.s32 %v976, %v978
    %v980 = vrot.slane %v973, %v979
    %v981 = vcombine.low %v901, %v902
    %v983 = vunpack.c.l.s4 1983009808
    %v984 = vunpack.c.0.s8 %v983
    %v985 = vlaneseq
    %v986 = vshrl.u32 %v985, 7
    %v987 = vsub.s32 %v984, %v986
    %v988 = vrot.slane %v981, %v987
    %v989 = vcombine.low %v893, %v900
    %v991 = vunpack.c.l.s4 1983009808
    %v992 = vunpack.c.0.s8 %v991
    %v993 = vlaneseq
    %v994 = vshrl.u32 %v993, 7
    %v995 = vsub.s32 %v992, %v994
    %v996 = vrot.slane %v989, %v995
    %v997 = vcombine.low %v903, %v904
    %v999 = vunpack.c.l.s4 1983009808
    %v1000 = vunpack.c.0.s8 %v999
    %v1001 = vlaneseq
    %v1002 = vshrl.u32 %v1001, 7
    %v1003 = vsub.s32 %v1000, %v1002
    %v1004 = vrot.slane %v997, %v1003
    %v1005 = vcombine.low %v980, %v988
    %v1006 = vcombine.high %v980, %v988
    %v1008 = vunpack.c.l.s4 1934713408
    %v1009 = vunpack.c.0.s8 %v1008
    %v1010 = vlaneseq
    %v1011 = vshrl.u32 %v1010, 7
    %v1012 = vsub.s32 %v1009, %v1011
    %v1013 = vrot.slane %v1005, %v1012
    %v1015 = vunpack.c.l.s4 1934713408
    %v1016 = vunpack.c.0.s8 %v1015
    %v1017 = vlaneseq
    %v1018 = vshrl.u32 %v1017, 7
    %v1019 = vsub.s32 %v1016, %v1018
    %v1020 = vrot.slane %v1006, %v1019
    %v1021 = vcombine.low %v996, %v1004
    %v1022 = vcombine.high %v996, %v1004
    %v1024 = vunpack.c.l.s4 1934713408
    %v1025 = vunpack.c.0.s8 %v1024
    %v1026 = vlaneseq
    %v1027 = vshrl.u32 %v1026, 7
    %v1028 = vsub.s32 %v1025, %v1027
    %v1029 = vrot.slane %v1021, %v1028
    %v1031 = vunpack.c.l.s4 1934713408
    %v1032 = vunpack.c.0.s8 %v1031
    %v1033 = vlaneseq
    %v1034 = vshrl.u32 %v1033, 7
    %v1035 = vsub.s32 %v1032, %v1034
    %v1036 = vrot.slane %v1022, %v1035
    %v1037 = vcombine.low %v1013, %v1029
    %v1038 = vcombine.high %v1013, %v1029
    %v1039 = vcombine.low %v1020, %v1036
    %v1040 = vcombine.high %v1020, %v1036
    %vm1041 = vcmask 64512
    %v1043 = vsel %vm1041, %v377, 0
    %v1046 = vsel %vm1041, %v673, 0
    %1048 = vmatprep.subr.mxu0 0.0
    %1049 = vmatpush1.xpose.msra.mxu0 %v1046
    %1050 = vmatprep.subr.mxu0 0.0
    %1051 = vmatpush1.xpose.msra.mxu0 0.0
    %1052 = vmatprep.subr.mxu0 0.0
    %1053 = vmatpush1.xpose.msra.mxu0 0.0
    %1054 = vmatprep.subr.mxu0 0.0
    %1055 = vmatpush1.xpose.msra.mxu0 0.0
    %1056 = vmatprep.subr.mxu0 0.0
    %1057 = vmatpush1.xpose.msra.mxu0 0.0
    %1058 = vmatprep.subr.mxu0 0.0
    %1059 = vmatpush1.xpose.msra.mxu0 0.0
    %1060 = vmatprep.subr.mxu0 0.0
    %1061 = vmatpush1.xpose.msra.mxu0 0.0
    %1062 = vmatprep.subr.mxu0 0.0
    %1063 = vmatpush1.xpose.msra.mxu0 0.0
    %1064 = vmatprep.subr.mxu0 0.0
    %1065 = vmatpush1.xpose.msra.mxu0 0.0
    %1066 = vmatprep.subr.mxu0 0.0
    %1067 = vmatpush1.xpose.msra.mxu0 0.0
    %1068 = vmatprep.subr.mxu0 0.0
    %1069 = vmatpush1.xpose.msra.mxu0 0.0
    %1070 = vmatprep.subr.mxu0 0.0
    %1071 = vmatpush1.xpose.msra.mxu0 0.0
    %1072 = vmatprep.subr.mxu0 0.0
    %1073 = vmatpush1.xpose.msra.mxu0 0.0
    %1074 = vmatprep.subr.mxu0 0.0
    %1075 = vmatpush1.xpose.msra.mxu0 0.0
    %1076 = vmatprep.subr.mxu0 0.0
    %1077 = vmatpush1.xpose.msra.mxu0 0.0
    %1078 = vmatprep.subr.mxu0 0.0
    %1079 = vmatpush1.xpose.msra.mxu0 0.0
    %1080 = vmatprep.subr.mxu0 0.0
    %1081 = vmatpush1.xpose.msra.mxu0 0.0
    %1082 = vmatprep.subr.mxu0 0.0
    %1083 = vmatpush1.xpose.msra.mxu0 0.0
    %1084 = vmatprep.subr.mxu0 0.0
    %1085 = vmatpush1.xpose.msra.mxu0 0.0
    %1086 = vmatprep.subr.mxu0 0.0
    %1087 = vmatpush1.xpose.msra.mxu0 0.0
    %1088 = vmatprep.subr.mxu0 0.0
    %1089 = vmatpush1.xpose.msra.mxu0 0.0
    %1090 = vmatprep.subr.mxu0 0.0
    %1091 = vmatpush1.xpose.msra.mxu0 0.0
    %1092 = vmatprep.subr.mxu0 0.0
    %1093 = vmatpush1.xpose.msra.mxu0 0.0
    %1094 = vmatprep.subr.mxu0 0.0
    %1095 = vmatpush1.xpose.msra.mxu0 0.0
    %1096 = vmatprep.subr.mxu0 0.0
    %1097 = vmatpush1.xpose.msra.mxu0 0.0
    %1098 = vmatprep.subr.mxu0 0.0
    %1099 = vmatpush1.xpose.msra.mxu0 0.0
    %1100 = vmatprep.subr.mxu0 0.0
    %1101 = vmatpush1.xpose.msra.mxu0 0.0
    %1102 = vmatprep.subr.mxu0 0.0
    %1103 = vmatpush1.xpose.msra.mxu0 0.0
    %1104 = vmatprep.subr.mxu0 0.0
    %1105 = vmatpush1.xpose.msra.mxu0 0.0
    %1106 = vmatprep.subr.mxu0 0.0
    %1107 = vmatpush1.xpose.msra.mxu0 0.0
    %1108 = vmatprep.subr.mxu0 0.0
    %1109 = vmatpush1.xpose.msra.mxu0 0.0
    %1110 = vmatprep.subr.mxu0 0.0
    %1111 = vmatpush1.xpose.msra.mxu0 0.0
    %1112 = vmatprep.mubr.f32.mxu0 0.0
    %1113 = vmatmul.mubr.f32.gmra.mrb[0].mxu0 %v1043
    %v1114 = vpop.f32.mrb[0].mxu0
    %v1115 = vadd.f32 0.0, %v1114
    %v1116 = vpop.f32.mrb[0].mxu0
    %1117 = vdwg.mxu0
    %v1119 = vsel %vm1041, %v378, 0
    %v1122 = vsel %vm1041, %v674, 0
    %1124 = vmatprep.subr.mxu0 0.0
    %1125 = vmatpush1.xpose.msra.mxu0 %v1122
    %1126 = vmatprep.subr.mxu0 0.0
    %1127 = vmatpush1.xpose.msra.mxu0 0.0
    %1128 = vmatprep.subr.mxu0 0.0
    %1129 = vmatpush1.xpose.msra.mxu0 0.0
    %1130 = vmatprep.subr.mxu0 0.0
    %1131 = vmatpush1.xpose.msra.mxu0 0.0
    %1132 = vmatprep.subr.mxu0 0.0
    %1133 = vmatpush1.xpose.msra.mxu0 0.0
    %1134 = vmatprep.subr.mxu0 0.0
    %1135 = vmatpush1.xpose.msra.mxu0 0.0
    %1136 = vmatprep.subr.mxu0 0.0
    %1137 = vmatpush1.xpose.msra.mxu0 0.0
    %1138 = vmatprep.subr.mxu0 0.0
    %1139 = vmatpush1.xpose.msra.mxu0 0.0
    %1140 = vmatprep.subr.mxu0 0.0
    %1141 = vmatpush1.xpose.msra.mxu0 0.0
    %1142 = vmatprep.subr.mxu0 0.0
    %1143 = vmatpush1.xpose.msra.mxu0 0.0
    %1144 = vmatprep.subr.mxu0 0.0
    %1145 = vmatpush1.xpose.msra.mxu0 0.0
    %1146 = vmatprep.subr.mxu0 0.0
    %1147 = vmatpush1.xpose.msra.mxu0 0.0
    %1148 = vmatprep.subr.mxu0 0.0
    %1149 = vmatpush1.xpose.msra.mxu0 0.0
    %1150 = vmatprep.subr.mxu0 0.0
    %1151 = vmatpush1.xpose.msra.mxu0 0.0
    %1152 = vmatprep.subr.mxu0 0.0
    %1153 = vmatpush1.xpose.msra.mxu0 0.0
    %1154 = vmatprep.subr.mxu0 0.0
    %1155 = vmatpush1.xpose.msra.mxu0 0.0
    %1156 = vmatprep.subr.mxu0 0.0
    %1157 = vmatpush1.xpose.msra.mxu0 0.0
    %1158 = vmatprep.subr.mxu0 0.0
    %1159 = vmatpush1.xpose.msra.mxu0 0.0
    %1160 = vmatprep.subr.mxu0 0.0
    %1161 = vmatpush1.xpose.msra.mxu0 0.0
    %1162 = vmatprep.subr.mxu0 0.0
    %1163 = vmatpush1.xpose.msra.mxu0 0.0
    %1164 = vmatprep.subr.mxu0 0.0
    %1165 = vmatpush1.xpose.msra.mxu0 0.0
    %1166 = vmatprep.subr.mxu0 0.0
    %1167 = vmatpush1.xpose.msra.mxu0 0.0
    %1168 = vmatprep.subr.mxu0 0.0
    %1169 = vmatpush1.xpose.msra.mxu0 0.0
    %1170 = vmatprep.subr.mxu0 0.0
    %1171 = vmatpush1.xpose.msra.mxu0 0.0
    %1172 = vmatprep.subr.mxu0 0.0
    %1173 = vmatpush1.xpose.msra.mxu0 0.0
    %1174 = vmatprep.subr.mxu0 0.0
    %1175 = vmatpush1.xpose.msra.mxu0 0.0
    %1176 = vmatprep.subr.mxu0 0.0
    %1177 = vmatpush1.xpose.msra.mxu0 0.0
    %1178 = vmatprep.subr.mxu0 0.0
    %1179 = vmatpush1.xpose.msra.mxu0 0.0
    %1180 = vmatprep.subr.mxu0 0.0
    %1181 = vmatpush1.xpose.msra.mxu0 0.0
    %1182 = vmatprep.subr.mxu0 0.0
    %1183 = vmatpush1.xpose.msra.mxu0 0.0
    %1184 = vmatprep.subr.mxu0 0.0
    %1185 = vmatpush1.xpose.msra.mxu0 0.0
    %1186 = vmatprep.subr.mxu0 0.0
    %1187 = vmatpush1.xpose.msra.mxu0 0.0
    %1188 = vmatprep.mubr.f32.mxu0 0.0
    %1189 = vmatmul.mubr.f32.gmra.mrb[0].mxu0 %v1119
    %v1190 = vpop.f32.mrb[0].mxu0
    %v1191 = vadd.f32 0.0, %v1190
    %v1192 = vpop.f32.mrb[0].mxu0
    %1193 = vdwg.mxu0
    %v1195 = vsel %vm1041, %v379, 0
    %v1198 = vsel %vm1041, %v675, 0
    %1200 = vmatprep.subr.mxu0 0.0
    %1201 = vmatpush1.xpose.msra.mxu0 %v1198
    %1202 = vmatprep.subr.mxu0 0.0
    %1203 = vmatpush1.xpose.msra.mxu0 0.0
    %1204 = vmatprep.subr.mxu0 0.0
    %1205 = vmatpush1.xpose.msra.mxu0 0.0
    %1206 = vmatprep.subr.mxu0 0.0
    %1207 = vmatpush1.xpose.msra.mxu0 0.0
    %1208 = vmatprep.subr.mxu0 0.0
    %1209 = vmatpush1.xpose.msra.mxu0 0.0
    %1210 = vmatprep.subr.mxu0 0.0
    %1211 = vmatpush1.xpose.msra.mxu0 0.0
    %1212 = vmatprep.subr.mxu0 0.0
    %1213 = vmatpush1.xpose.msra.mxu0 0.0
    %1214 = vmatprep.subr.mxu0 0.0
    %1215 = vmatpush1.xpose.msra.mxu0 0.0
    %1216 = vmatprep.subr.mxu0 0.0
    %1217 = vmatpush1.xpose.msra.mxu0 0.0
    %1218 = vmatprep.subr.mxu0 0.0
    %1219 = vmatpush1.xpose.msra.mxu0 0.0
    %1220 = vmatprep.subr.mxu0 0.0
    %1221 = vmatpush1.xpose.msra.mxu0 0.0
    %1222 = vmatprep.subr.mxu0 0.0
    %1223 = vmatpush1.xpose.msra.mxu0 0.0
    %1224 = vmatprep.subr.mxu0 0.0
    %1225 = vmatpush1.xpose.msra.mxu0 0.0
    %1226 = vmatprep.subr.mxu0 0.0
    %1227 = vmatpush1.xpose.msra.mxu0 0.0
    %1228 = vmatprep.subr.mxu0 0.0
    %1229 = vmatpush1.xpose.msra.mxu0 0.0
    %1230 = vmatprep.subr.mxu0 0.0
    %1231 = vmatpush1.xpose.msra.mxu0 0.0
    %1232 = vmatprep.subr.mxu0 0.0
    %1233 = vmatpush1.xpose.msra.mxu0 0.0
    %1234 = vmatprep.subr.mxu0 0.0
    %1235 = vmatpush1.xpose.msra.mxu0 0.0
    %1236 = vmatprep.subr.mxu0 0.0
    %1237 = vmatpush1.xpose.msra.mxu0 0.0
    %1238 = vmatprep.subr.mxu0 0.0
    %1239 = vmatpush1.xpose.msra.mxu0 0.0
    %1240 = vmatprep.subr.mxu0 0.0
    %1241 = vmatpush1.xpose.msra.mxu0 0.0
    %1242 = vmatprep.subr.mxu0 0.0
    %1243 = vmatpush1.xpose.msra.mxu0 0.0
    %1244 = vmatprep.subr.mxu0 0.0
    %1245 = vmatpush1.xpose.msra.mxu0 0.0
    %1246 = vmatprep.subr.mxu0 0.0
    %1247 = vmatpush1.xpose.msra.mxu0 0.0
    %1248 = vmatprep.subr.mxu0 0.0
    %1249 = vmatpush1.xpose.msra.mxu0 0.0
    %1250 = vmatprep.subr.mxu0 0.0
    %1251 = vmatpush1.xpose.msra.mxu0 0.0
    %1252 = vmatprep.subr.mxu0 0.0
    %1253 = vmatpush1.xpose.msra.mxu0 0.0
    %1254 = vmatprep.subr.mxu0 0.0
    %1255 = vmatpush1.xpose.msra.mxu0 0.0
    %1256 = vmatprep.subr.mxu0 0.0
    %1257 = vmatpush1.xpose.msra.mxu0 0.0
    %1258 = vmatprep.subr.mxu0 0.0
    %1259 = vmatpush1.xpose.msra.mxu0 0.0
    %1260 = vmatprep.subr.mxu0 0.0
    %1261 = vmatpush1.xpose.msra.mxu0 0.0
    %1262 = vmatprep.subr.mxu0 0.0
    %1263 = vmatpush1.xpose.msra.mxu0 0.0
    %1264 = vmatprep.mubr.f32.mxu0 0.0
    %1265 = vmatmul.mubr.f32.gmra.mrb[0].mxu0 %v1195
    %v1266 = vpop.f32.mrb[0].mxu0
    %v1267 = vadd.f32 0.0, %v1266
    %v1268 = vpop.f32.mrb[0].mxu0
    %1269 = vdwg.mxu0
    %v1271 = vsel %vm1041, %v380, 0
    %v1274 = vsel %vm1041, %v676, 0
    %1276 = vmatprep.subr.mxu0 0.0
    %1277 = vmatpush1.xpose.msra.mxu0 %v1274
    %1278 = vmatprep.subr.mxu0 0.0
    %1279 = vmatpush1.xpose.msra.mxu0 0.0
    %1280 = vmatprep.subr.mxu0 0.0
    %1281 = vmatpush1.xpose.msra.mxu0 0.0
    %1282 = vmatprep.subr.mxu0 0.0
    %1283 = vmatpush1.xpose.msra.mxu0 0.0
    %1284 = vmatprep.subr.mxu0 0.0
    %1285 = vmatpush1.xpose.msra.mxu0 0.0
    %1286 = vmatprep.subr.mxu0 0.0
    %1287 = vmatpush1.xpose.msra.mxu0 0.0
    %1288 = vmatprep.subr.mxu0 0.0
    %1289 = vmatpush1.xpose.msra.mxu0 0.0
    %1290 = vmatprep.subr.mxu0 0.0
    %1291 = vmatpush1.xpose.msra.mxu0 0.0
    %1292 = vmatprep.subr.mxu0 0.0
    %1293 = vmatpush1.xpose.msra.mxu0 0.0
    %1294 = vmatprep.subr.mxu0 0.0
    %1295 = vmatpush1.xpose.msra.mxu0 0.0
    %1296 = vmatprep.subr.mxu0 0.0
    %1297 = vmatpush1.xpose.msra.mxu0 0.0
    %1298 = vmatprep.subr.mxu0 0.0
    %1299 = vmatpush1.xpose.msra.mxu0 0.0
    %1300 = vmatprep.subr.mxu0 0.0
    %1301 = vmatpush1.xpose.msra.mxu0 0.0
    %1302 = vmatprep.subr.mxu0 0.0
    %1303 = vmatpush1.xpose.msra.mxu0 0.0
    %1304 = vmatprep.subr.mxu0 0.0
    %1305 = vmatpush1.xpose.msra.mxu0 0.0
    %1306 = vmatprep.subr.mxu0 0.0
    %1307 = vmatpush1.xpose.msra.mxu0 0.0
    %1308 = vmatprep.subr.mxu0 0.0
    %1309 = vmatpush1.xpose.msra.mxu0 0.0
    %1310 = vmatprep.subr.mxu0 0.0
    %1311 = vmatpush1.xpose.msra.mxu0 0.0
    %1312 = vmatprep.subr.mxu0 0.0
    %1313 = vmatpush1.xpose.msra.mxu0 0.0
    %1314 = vmatprep.subr.mxu0 0.0
    %1315 = vmatpush1.xpose.msra.mxu0 0.0
    %1316 = vmatprep.subr.mxu0 0.0
    %1317 = vmatpush1.xpose.msra.mxu0 0.0
    %1318 = vmatprep.subr.mxu0 0.0
    %1319 = vmatpush1.xpose.msra.mxu0 0.0
    %1320 = vmatprep.subr.mxu0 0.0
    %1321 = vmatpush1.xpose.msra.mxu0 0.0
    %1322 = vmatprep.subr.mxu0 0.0
    %1323 = vmatpush1.xpose.msra.mxu0 0.0
    %1324 = vmatprep.subr.mxu0 0.0
    %1325 = vmatpush1.xpose.msra.mxu0 0.0
    %1326 = vmatprep.subr.mxu0 0.0
    %1327 = vmatpush1.xpose.msra.mxu0 0.0
    %1328 = vmatprep.subr.mxu0 0.0
    %1329 = vmatpush1.xpose.msra.mxu0 0.0
    %1330 = vmatprep.subr.mxu0 0.0
    %1331 = vmatpush1.xpose.msra.mxu0 0.0
    %1332 = vmatprep.subr.mxu0 0.0
    %1333 = vmatpush1.xpose.msra.mxu0 0.0
    %1334 = vmatprep.subr.mxu0 0.0
    %1335 = vmatpush1.xpose.msra.mxu0 0.0
    %1336 = vmatprep.subr.mxu0 0.0
    %1337 = vmatpush1.xpose.msra.mxu0 0.0
    %1338 = vmatprep.subr.mxu0 0.0
    %1339 = vmatpush1.xpose.msra.mxu0 0.0
    %1340 = vmatprep.mubr.f32.mxu0 0.0
    %1341 = vmatmul.mubr.f32.gmra.mrb[0].mxu0 %v1271
    %v1342 = vpop.f32.mrb[0].mxu0
    %v1343 = vadd.f32 0.0, %v1342
    %v1344 = vpop.f32.mrb[0].mxu0
    %1345 = vdwg.mxu0
    %v1347 = vsel %vm1041, %v445, 0
    %v1350 = vsel %vm1041, %v741, 0
    %1352 = vmatprep.subr.mxu0 0.0
    %1353 = vmatpush1.xpose.msra.mxu0 %v1350
    %1354 = vmatprep.subr.mxu0 0.0
    %1355 = vmatpush1.xpose.msra.mxu0 0.0
    %1356 = vmatprep.subr.mxu0 0.0
    %1357 = vmatpush1.xpose.msra.mxu0 0.0
    %1358 = vmatprep.subr.mxu0 0.0
    %1359 = vmatpush1.xpose.msra.mxu0 0.0
    %1360 = vmatprep.subr.mxu0 0.0
    %1361 = vmatpush1.xpose.msra.mxu0 0.0
    %1362 = vmatprep.subr.mxu0 0.0
    %1363 = vmatpush1.xpose.msra.mxu0 0.0
    %1364 = vmatprep.subr.mxu0 0.0
    %1365 = vmatpush1.xpose.msra.mxu0 0.0
    %1366 = vmatprep.subr.mxu0 0.0
    %1367 = vmatpush1.xpose.msra.mxu0 0.0
    %1368 = vmatprep.subr.mxu0 0.0
    %1369 = vmatpush1.xpose.msra.mxu0 0.0
    %1370 = vmatprep.subr.mxu0 0.0
    %1371 = vmatpush1.xpose.msra.mxu0 0.0
    %1372 = vmatprep.subr.mxu0 0.0
    %1373 = vmatpush1.xpose.msra.mxu0 0.0
    %1374 = vmatprep.subr.mxu0 0.0
    %1375 = vmatpush1.xpose.msra.mxu0 0.0
    %1376 = vmatprep.subr.mxu0 0.0
    %1377 = vmatpush1.xpose.msra.mxu0 0.0
    %1378 = vmatprep.subr.mxu0 0.0
    %1379 = vmatpush1.xpose.msra.mxu0 0.0
    %1380 = vmatprep.subr.mxu0 0.0
    %1381 = vmatpush1.xpose.msra.mxu0 0.0
    %1382 = vmatprep.subr.mxu0 0.0
    %1383 = vmatpush1.xpose.msra.mxu0 0.0
    %1384 = vmatprep.subr.mxu0 0.0
    %1385 = vmatpush1.xpose.msra.mxu0 0.0
    %1386 = vmatprep.subr.mxu0 0.0
    %1387 = vmatpush1.xpose.msra.mxu0 0.0
    %1388 = vmatprep.subr.mxu0 0.0
    %1389 = vmatpush1.xpose.msra.mxu0 0.0
    %1390 = vmatprep.subr.mxu0 0.0
    %1391 = vmatpush1.xpose.msra.mxu0 0.0
    %1392 = vmatprep.subr.mxu0 0.0
    %1393 = vmatpush1.xpose.msra.mxu0 0.0
    %1394 = vmatprep.subr.mxu0 0.0
    %1395 = vmatpush1.xpose.msra.mxu0 0.0
    %1396 = vmatprep.subr.mxu0 0.0
    %1397 = vmatpush1.xpose.msra.mxu0 0.0
    %1398 = vmatprep.subr.mxu0 0.0
    %1399 = vmatpush1.xpose.msra.mxu0 0.0
    %1400 = vmatprep.subr.mxu0 0.0
    %1401 = vmatpush1.xpose.msra.mxu0 0.0
    %1402 = vmatprep.subr.mxu0 0.0
    %1403 = vmatpush1.xpose.msra.mxu0 0.0
    %1404 = vmatprep.subr.mxu0 0.0
    %1405 = vmatpush1.xpose.msra.mxu0 0.0
    %1406 = vmatprep.subr.mxu0 0.0
    %1407 = vmatpush1.xpose.msra.mxu0 0.0
    %1408 = vmatprep.subr.mxu0 0.0
    %1409 = vmatpush1.xpose.msra.mxu0 0.0
    %1410 = vmatprep.subr.mxu0 0.0
    %1411 = vmatpush1.xpose.msra.mxu0 0.0
    %1412 = vmatprep.subr.mxu0 0.0
    %1413 = vmatpush1.xpose.msra.mxu0 0.0
    %1414 = vmatprep.subr.mxu0 0.0
    %1415 = vmatpush1.xpose.msra.mxu0 0.0
    %1416 = vmatprep.mubr.f32.mxu0 0.0
    %1417 = vmatmul.mubr.f32.gmra.mrb[0].mxu0 %v1347
    %v1418 = vpop.f32.mrb[0].mxu0
    %v1419 = vadd.f32 0.0, %v1418
    %v1420 = vpop.f32.mrb[0].mxu0
    %1421 = vdwg.mxu0
    %v1423 = vsel %vm1041, %v446, 0
    %v1426 = vsel %vm1041, %v742, 0
    %1428 = vmatprep.subr.mxu0 0.0
    %1429 = vmatpush1.xpose.msra.mxu0 %v1426
    %1430 = vmatprep.subr.mxu0 0.0
    %1431 = vmatpush1.xpose.msra.mxu0 0.0
    %1432 = vmatprep.subr.mxu0 0.0
    %1433 = vmatpush1.xpose.msra.mxu0 0.0
    %1434 = vmatprep.subr.mxu0 0.0
    %1435 = vmatpush1.xpose.msra.mxu0 0.0
    %1436 = vmatprep.subr.mxu0 0.0
    %1437 = vmatpush1.xpose.msra.mxu0 0.0
    %1438 = vmatprep.subr.mxu0 0.0
    %1439 = vmatpush1.xpose.msra.mxu0 0.0
    %1440 = vmatprep.subr.mxu0 0.0
    %1441 = vmatpush1.xpose.msra.mxu0 0.0
    %1442 = vmatprep.subr.mxu0 0.0
    %1443 = vmatpush1.xpose.msra.mxu0 0.0
    %1444 = vmatprep.subr.mxu0 0.0
    %1445 = vmatpush1.xpose.msra.mxu0 0.0
    %1446 = vmatprep.subr.mxu0 0.0
    %1447 = vmatpush1.xpose.msra.mxu0 0.0
    %1448 = vmatprep.subr.mxu0 0.0
    %1449 = vmatpush1.xpose.msra.mxu0 0.0
    %1450 = vmatprep.subr.mxu0 0.0
    %1451 = vmatpush1.xpose.msra.mxu0 0.0
    %1452 = vmatprep.subr.mxu0 0.0
    %1453 = vmatpush1.xpose.msra.mxu0 0.0
    %1454 = vmatprep.subr.mxu0 0.0
    %1455 = vmatpush1.xpose.msra.mxu0 0.0
    %1456 = vmatprep.subr.mxu0 0.0
    %1457 = vmatpush1.xpose.msra.mxu0 0.0
    %1458 = vmatprep.subr.mxu0 0.0
    %1459 = vmatpush1.xpose.msra.mxu0 0.0
    %1460 = vmatprep.subr.mxu0 0.0
    %1461 = vmatpush1.xpose.msra.mxu0 0.0
    %1462 = vmatprep.subr.mxu0 0.0
    %1463 = vmatpush1.xpose.msra.mxu0 0.0
    %1464 = vmatprep.subr.mxu0 0.0
    %1465 = vmatpush1.xpose.msra.mxu0 0.0
    %1466 = vmatprep.subr.mxu0 0.0
    %1467 = vmatpush1.xpose.msra.mxu0 0.0
    %1468 = vmatprep.subr.mxu0 0.0
    %1469 = vmatpush1.xpose.msra.mxu0 0.0
    %1470 = vmatprep.subr.mxu0 0.0
    %1471 = vmatpush1.xpose.msra.mxu0 0.0
    %1472 = vmatprep.subr.mxu0 0.0
    %1473 = vmatpush1.xpose.msra.mxu0 0.0
    %1474 = vmatprep.subr.mxu0 0.0
    %1475 = vmatpush1.xpose.msra.mxu0 0.0
    %1476 = vmatprep.subr.mxu0 0.0
    %1477 = vmatpush1.xpose.msra.mxu0 0.0
    %1478 = vmatprep.subr.mxu0 0.0
    %1479 = vmatpush1.xpose.msra.mxu0 0.0
    %1480 = vmatprep.subr.mxu0 0.0
    %1481 = vmatpush1.xpose.msra.mxu0 0.0
    %1482 = vmatprep.subr.mxu0 0.0
    %1483 = vmatpush1.xpose.msra.mxu0 0.0
    %1484 = vmatprep.subr.mxu0 0.0
    %1485 = vmatpush1.xpose.msra.mxu0 0.0
    %1486 = vmatprep.subr.mxu0 0.0
    %1487 = vmatpush1.xpose.msra.mxu0 0.0
    %1488 = vmatprep.subr.mxu0 0.0
    %1489 = vmatpush1.xpose.msra.mxu0 0.0
    %1490 = vmatprep.subr.mxu0 0.0
    %1491 = vmatpush1.xpose.msra.mxu0 0.0
    %1492 = vmatprep.mubr.f32.mxu0 0.0
    %1493 = vmatmul.mubr.f32.gmra.mrb[0].mxu0 %v1423
    %v1494 = vpop.f32.mrb[0].mxu0
    %v1495 = vadd.f32 0.0, %v1494
    %v1496 = vpop.f32.mrb[0].mxu0
    %1497 = vdwg.mxu0
    %v1499 = vsel %vm1041, %v447, 0
    %v1502 = vsel %vm1041, %v743, 0
    %1504 = vmatprep.subr.mxu0 0.0
    %1505 = vmatpush1.xpose.msra.mxu0 %v1502
    %1506 = vmatprep.subr.mxu0 0.0
    %1507 = vmatpush1.xpose.msra.mxu0 0.0
    %1508 = vmatprep.subr.mxu0 0.0
    %1509 = vmatpush1.xpose.msra.mxu0 0.0
    %1510 = vmatprep.subr.mxu0 0.0
    %1511 = vmatpush1.xpose.msra.mxu0 0.0
    %1512 = vmatprep.subr.mxu0 0.0
    %1513 = vmatpush1.xpose.msra.mxu0 0.0
    %1514 = vmatprep.subr.mxu0 0.0
    %1515 = vmatpush1.xpose.msra.mxu0 0.0
    %1516 = vmatprep.subr.mxu0 0.0
    %1517 = vmatpush1.xpose.msra.mxu0 0.0
    %1518 = vmatprep.subr.mxu0 0.0
    %1519 = vmatpush1.xpose.msra.mxu0 0.0
    %1520 = vmatprep.subr.mxu0 0.0
    %1521 = vmatpush1.xpose.msra.mxu0 0.0
    %1522 = vmatprep.subr.mxu0 0.0
    %1523 = vmatpush1.xpose.msra.mxu0 0.0
    %1524 = vmatprep.subr.mxu0 0.0
    %1525 = vmatpush1.xpose.msra.mxu0 0.0
    %1526 = vmatprep.subr.mxu0 0.0
    %1527 = vmatpush1.xpose.msra.mxu0 0.0
    %1528 = vmatprep.subr.mxu0 0.0
    %1529 = vmatpush1.xpose.msra.mxu0 0.0
    %1530 = vmatprep.subr.mxu0 0.0
    %1531 = vmatpush1.xpose.msra.mxu0 0.0
    %1532 = vmatprep.subr.mxu0 0.0
    %1533 = vmatpush1.xpose.msra.mxu0 0.0
    %1534 = vmatprep.subr.mxu0 0.0
    %1535 = vmatpush1.xpose.msra.mxu0 0.0
    %1536 = vmatprep.subr.mxu0 0.0
    %1537 = vmatpush1.xpose.msra.mxu0 0.0
    %1538 = vmatprep.subr.mxu0 0.0
    %1539 = vmatpush1.xpose.msra.mxu0 0.0
    %1540 = vmatprep.subr.mxu0 0.0
    %1541 = vmatpush1.xpose.msra.mxu0 0.0
    %1542 = vmatprep.subr.mxu0 0.0
    %1543 = vmatpush1.xpose.msra.mxu0 0.0
    %1544 = vmatprep.subr.mxu0 0.0
    %1545 = vmatpush1.xpose.msra.mxu0 0.0
    %1546 = vmatprep.subr.mxu0 0.0
    %1547 = vmatpush1.xpose.msra.mxu0 0.0
    %1548 = vmatprep.subr.mxu0 0.0
    %1549 = vmatpush1.xpose.msra.mxu0 0.0
    %1550 = vmatprep.subr.mxu0 0.0
    %1551 = vmatpush1.xpose.msra.mxu0 0.0
    %1552 = vmatprep.subr.mxu0 0.0
    %1553 = vmatpush1.xpose.msra.mxu0 0.0
    %1554 = vmatprep.subr.mxu0 0.0
    %1555 = vmatpush1.xpose.msra.mxu0 0.0
    %1556 = vmatprep.subr.mxu0 0.0
    %1557 = vmatpush1.xpose.msra.mxu0 0.0
    %1558 = vmatprep.subr.mxu0 0.0
    %1559 = vmatpush1.xpose.msra.mxu0 0.0
    %1560 = vmatprep.subr.mxu0 0.0
    %1561 = vmatpush1.xpose.msra.mxu0 0.0
    %1562 = vmatprep.subr.mxu0 0.0
    %1563 = vmatpush1.xpose.msra.mxu0 0.0
    %1564 = vmatprep.subr.mxu0 0.0
    %1565 = vmatpush1.xpose.msra.mxu0 0.0
    %1566 = vmatprep.subr.mxu0 0.0
    %1567 = vmatpush1.xpose.msra.mxu0 0.0
    %1568 = vmatprep.mubr.f32.mxu0 0.0
    %1569 = vmatmul.mubr.f32.gmra.mrb[0].mxu0 %v1499
    %v1570 = vpop.f32.mrb[0].mxu0
    %v1571 = vadd.f32 0.0, %v1570
    %v1572 = vpop.f32.mrb[0].mxu0
    %1573 = vdwg.mxu0
    %v1575 = vsel %vm1041, %v448, 0
    %v1578 = vsel %vm1041, %v744, 0
    %1580 = vmatprep.subr.mxu0 0.0
    %1581 = vmatpush1.xpose.msra.mxu0 %v1578
    %1582 = vmatprep.subr.mxu0 0.0
    %1583 = vmatpush1.xpose.msra.mxu0 0.0
    %1584 = vmatprep.subr.mxu0 0.0
    %1585 = vmatpush1.xpose.msra.mxu0 0.0
    %1586 = vmatprep.subr.mxu0 0.0
    %1587 = vmatpush1.xpose.msra.mxu0 0.0
    %1588 = vmatprep.subr.mxu0 0.0
    %1589 = vmatpush1.xpose.msra.mxu0 0.0
    %1590 = vmatprep.subr.mxu0 0.0
    %1591 = vmatpush1.xpose.msra.mxu0 0.0
    %1592 = vmatprep.subr.mxu0 0.0
    %1593 = vmatpush1.xpose.msra.mxu0 0.0
    %1594 = vmatprep.subr.mxu0 0.0
    %1595 = vmatpush1.xpose.msra.mxu0 0.0
    %1596 = vmatprep.subr.mxu0 0.0
    %1597 = vmatpush1.xpose.msra.mxu0 0.0
    %1598 = vmatprep.subr.mxu0 0.0
    %1599 = vmatpush1.xpose.msra.mxu0 0.0
    %1600 = vmatprep.subr.mxu0 0.0
    %1601 = vmatpush1.xpose.msra.mxu0 0.0
    %1602 = vmatprep.subr.mxu0 0.0
    %1603 = vmatpush1.xpose.msra.mxu0 0.0
    %1604 = vmatprep.subr.mxu0 0.0
    %1605 = vmatpush1.xpose.msra.mxu0 0.0
    %1606 = vmatprep.subr.mxu0 0.0
    %1607 = vmatpush1.xpose.msra.mxu0 0.0
    %1608 = vmatprep.subr.mxu0 0.0
    %1609 = vmatpush1.xpose.msra.mxu0 0.0
    %1610 = vmatprep.subr.mxu0 0.0
    %1611 = vmatpush1.xpose.msra.mxu0 0.0
    %1612 = vmatprep.subr.mxu0 0.0
    %1613 = vmatpush1.xpose.msra.mxu0 0.0
    %1614 = vmatprep.subr.mxu0 0.0
    %1615 = vmatpush1.xpose.msra.mxu0 0.0
    %1616 = vmatprep.subr.mxu0 0.0
    %1617 = vmatpush1.xpose.msra.mxu0 0.0
    %1618 = vmatprep.subr.mxu0 0.0
    %1619 = vmatpush1.xpose.msra.mxu0 0.0
    %1620 = vmatprep.subr.mxu0 0.0
    %1621 = vmatpush1.xpose.msra.mxu0 0.0
    %1622 = vmatprep.subr.mxu0 0.0
    %1623 = vmatpush1.xpose.msra.mxu0 0.0
    %1624 = vmatprep.subr.mxu0 0.0
    %1625 = vmatpush1.xpose.msra.mxu0 0.0
    %1626 = vmatprep.subr.mxu0 0.0
    %1627 = vmatpush1.xpose.msra.mxu0 0.0
    %1628 = vmatprep.subr.mxu0 0.0
    %1629 = vmatpush1.xpose.msra.mxu0 0.0
    %1630 = vmatprep.subr.mxu0 0.0
    %1631 = vmatpush1.xpose.msra.mxu0 0.0
    %1632 = vmatprep.subr.mxu0 0.0
    %1633 = vmatpush1.xpose.msra.mxu0 0.0
    %1634 = vmatprep.subr.mxu0 0.0
    %1635 = vmatpush1.xpose.msra.mxu0 0.0
    %1636 = vmatprep.subr.mxu0 0.0
    %1637 = vmatpush1.xpose.msra.mxu0 0.0
    %1638 = vmatprep.subr.mxu0 0.0
    %1639 = vmatpush1.xpose.msra.mxu0 0.0
    %1640 = vmatprep.subr.mxu0 0.0
    %1641 = vmatpush1.xpose.msra.mxu0 0.0
    %1642 = vmatprep.subr.mxu0 0.0
    %1643 = vmatpush1.xpose.msra.mxu0 0.0
    %1644 = vmatprep.mubr.f32.mxu0 0.0
    %1645 = vmatmul.mubr.f32.gmra.mrb[0].mxu0 %v1575
    %v1646 = vpop.f32.mrb[0].mxu0
    %v1647 = vadd.f32 0.0, %v1646
    %v1648 = vpop.f32.mrb[0].mxu0
    %1649 = vdwg.mxu0
    %v1650 = vsel %vm1041, %v1115, -inf
    %1651 = vmax.xlane.f32.xlu0 %v1650
    %v1652 = vpop.xlane.xlu0 %1651
    %v1653 = vsel %vm1041, %v1191, -inf
    %1654 = vmax.xlane.f32.xlu0 %v1653
    %v1655 = vpop.xlane.xlu0 %1654
    %v1656 = vsel %vm1041, %v1267, -inf
    %1657 = vmax.xlane.f32.xlu0 %v1656
    %v1658 = vpop.xlane.xlu0 %1657
    %v1659 = vsel %vm1041, %v1343, -inf
    %1660 = vmax.xlane.f32.xlu0 %v1659
    %v1661 = vpop.xlane.xlu0 %1660
    %v1662 = vsel %vm1041, %v1419, -inf
    %1663 = vmax.xlane.f32.xlu0 %v1662
    %v1664 = vpop.xlane.xlu0 %1663
    %v1665 = vsel %vm1041, %v1495, -inf
    %1666 = vmax.xlane.f32.xlu0 %v1665
    %v1667 = vpop.xlane.xlu0 %1666
    %v1668 = vsel %vm1041, %v1571, -inf
    %1669 = vmax.xlane.f32.xlu0 %v1668
    %v1670 = vpop.xlane.xlu0 %1669
    %v1671 = vsel %vm1041, %v1647, -inf
    %1672 = vmax.xlane.f32.xlu0 %v1671
    %v1673 = vpop.xlane.xlu0 %1672
    %v1674 = vsub.f32 %v1115, %v1652
    %v1675 = vsub.f32 %v1191, %v1655
    %v1676 = vsub.f32 %v1267, %v1658
    %v1677 = vsub.f32 %v1343, %v1661
    %v1678 = vsub.f32 %v1419, %v1664
    %v1679 = vsub.f32 %v1495, %v1667
    %v1680 = vsub.f32 %v1571, %v1670
    %v1681 = vsub.f32 %v1647, %v1673
    %v1682 = vmul.f32 %v1674, 1.442695
    %v1683 = vpow.pop %v1682
    %v1684 = vmul.f32 %v1675, 1.442695
    %v1685 = vpow.pop %v1684
    %v1686 = vmul.f32 %v1676, 1.442695
    %v1687 = vpow.pop %v1686
    %v1688 = vmul.f32 %v1677, 1.442695
    %v1689 = vpow.pop %v1688
    %v1690 = vmul.f32 %v1678, 1.442695
    %v1691 = vpow.pop %v1690
    %v1692 = vmul.f32 %v1679, 1.442695
    %v1693 = vpow.pop %v1692
    %v1694 = vmul.f32 %v1680, 1.442695
    %v1695 = vpow.pop %v1694
    %v1696 = vmul.f32 %v1681, 1.442695
    %v1697 = vpow.pop %v1696
    %v1698 = vsel %vm1041, %v1683, 0.0
    %1699 = vadd.xlane.f32.xlu0 %v1698
    %v1700 = vpop.xlane.xlu0 %1699
    %v1701 = vsel %vm1041, %v1685, 0.0
    %1702 = vadd.xlane.f32.xlu0 %v1701
    %v1703 = vpop.xlane.xlu0 %1702
    %v1704 = vsel %vm1041, %v1687, 0.0
    %1705 = vadd.xlane.f32.xlu0 %v1704
    %v1706 = vpop.xlane.xlu0 %1705
    %v1707 = vsel %vm1041, %v1689, 0.0
    %1708 = vadd.xlane.f32.xlu0 %v1707
    %v1709 = vpop.xlane.xlu0 %1708
    %v1710 = vsel %vm1041, %v1691, 0.0
    %1711 = vadd.xlane.f32.xlu0 %v1710
    %v1712 = vpop.xlane.xlu0 %1711
    %v1713 = vsel %vm1041, %v1693, 0.0
    %1714 = vadd.xlane.f32.xlu0 %v1713
    %v1715 = vpop.xlane.xlu0 %1714
    %v1716 = vsel %vm1041, %v1695, 0.0
    %1717 = vadd.xlane.f32.xlu0 %v1716
    %v1718 = vpop.xlane.xlu0 %1717
    %v1719 = vsel %vm1041, %v1697, 0.0
    %1720 = vadd.xlane.f32.xlu0 %v1719
    %v1721 = vpop.xlane.xlu0 %1720
    %v1722 = vrcp.pop %v1700
    %v1723 = vrcp.pop %v1703
    %v1724 = vrcp.pop %v1706
    %v1725 = vrcp.pop %v1709
    %v1726 = vrcp.pop %v1712
    %v1727 = vrcp.pop %v1715
    %v1728 = vrcp.pop %v1718
    %v1729 = vrcp.pop %v1721
    %v1730 = vmul.f32 %v1683, %v1722
    %v1731 = vmul.f32 %v1685, %v1723
    %v1732 = vmul.f32 %v1687, %v1724
    %v1733 = vmul.f32 %v1689, %v1725
    %v1734 = vmul.f32 %v1691, %v1726
    %v1735 = vmul.f32 %v1693, %v1727
    %v1736 = vmul.f32 %v1695, %v1728
    %v1737 = vmul.f32 %v1697, %v1729
    %v1739 = vsel %vm1041, %v1730, 0
    %1741 = vmatprep.subr.mxu0 0.0
    %1742 = vmatpush1.msra.mxu0 %v969
    %1743 = vmatprep.subr.mxu0 0.0
    %1744 = vmatpush1.msra.mxu0 0.0
    %1745 = vmatprep.subr.mxu0 0.0
    %1746 = vmatpush1.msra.mxu0 0.0
    %1747 = vmatprep.subr.mxu0 0.0
    %1748 = vmatpush1.msra.mxu0 0.0
    %1749 = vmatprep.subr.mxu0 0.0
    %1750 = vmatpush1.msra.mxu0 0.0
    %1751 = vmatprep.subr.mxu0 0.0
    %1752 = vmatpush1.msra.mxu0 0.0
    %1753 = vmatprep.subr.mxu0 0.0
    %1754 = vmatpush1.msra.mxu0 0.0
    %1755 = vmatprep.subr.mxu0 0.0
    %1756 = vmatpush1.msra.mxu0 0.0
    %1757 = vmatprep.subr.mxu0 0.0
    %1758 = vmatpush1.msra.mxu0 0.0
    %1759 = vmatprep.subr.mxu0 0.0
    %1760 = vmatpush1.msra.mxu0 0.0
    %1761 = vmatprep.subr.mxu0 0.0
    %1762 = vmatpush1.msra.mxu0 0.0
    %1763 = vmatprep.subr.mxu0 0.0
    %1764 = vmatpush1.msra.mxu0 0.0
    %1765 = vmatprep.subr.mxu0 0.0
    %1766 = vmatpush1.msra.mxu0 0.0
    %1767 = vmatprep.subr.mxu0 0.0
    %1768 = vmatpush1.msra.mxu0 0.0
    %1769 = vmatprep.subr.mxu0 0.0
    %1770 = vmatpush1.msra.mxu0 0.0
    %1771 = vmatprep.subr.mxu0 0.0
    %1772 = vmatpush1.msra.mxu0 0.0
    %1773 = vmatprep.subr.mxu0 0.0
    %1774 = vmatpush1.msra.mxu0 0.0
    %1775 = vmatprep.subr.mxu0 0.0
    %1776 = vmatpush1.msra.mxu0 0.0
    %1777 = vmatprep.subr.mxu0 0.0
    %1778 = vmatpush1.msra.mxu0 0.0
    %1779 = vmatprep.subr.mxu0 0.0
    %1780 = vmatpush1.msra.mxu0 0.0
    %1781 = vmatprep.subr.mxu0 0.0
    %1782 = vmatpush1.msra.mxu0 0.0
    %1783 = vmatprep.subr.mxu0 0.0
    %1784 = vmatpush1.msra.mxu0 0.0
    %1785 = vmatprep.subr.mxu0 0.0
    %1786 = vmatpush1.msra.mxu0 0.0
    %1787 = vmatprep.subr.mxu0 0.0
    %1788 = vmatpush1.msra.mxu0 0.0
    %1789 = vmatprep.subr.mxu0 0.0
    %1790 = vmatpush1.msra.mxu0 0.0
    %1791 = vmatprep.subr.mxu0 0.0
    %1792 = vmatpush1.msra.mxu0 0.0
    %1793 = vmatprep.subr.mxu0 0.0
    %1794 = vmatpush1.msra.mxu0 0.0
    %1795 = vmatprep.subr.mxu0 0.0
    %1796 = vmatpush1.msra.mxu0 0.0
    %1797 = vmatprep.subr.mxu0 0.0
    %1798 = vmatpush1.msra.mxu0 0.0
    %1799 = vmatprep.subr.mxu0 0.0
    %1800 = vmatpush1.msra.mxu0 0.0
    %1801 = vmatprep.subr.mxu0 0.0
    %1802 = vmatpush1.msra.mxu0 0.0
    %1803 = vmatprep.subr.mxu0 0.0
    %1804 = vmatpush1.msra.mxu0 0.0
    %1805 = vmatprep.mubr.f32.mxu0 0.0
    %1806 = vmatmul.mubr.f32.gmra.mrb[0].mxu0 %v1739
    %v1807 = vpop.f32.mrb[0].mxu0
    %v1808 = vadd.f32 0.0, %v1807
    %v1809 = vpop.f32.mrb[0].mxu0
    %1810 = vdwg.mxu0
    %v1812 = vsel %vm1041, %v1731, 0
    %1814 = vmatprep.subr.mxu0 0.0
    %1815 = vmatpush1.msra.mxu0 %v970
    %1816 = vmatprep.subr.mxu0 0.0
    %1817 = vmatpush1.msra.mxu0 0.0
    %1818 = vmatprep.subr.mxu0 0.0
    %1819 = vmatpush1.msra.mxu0 0.0
    %1820 = vmatprep.subr.mxu0 0.0
    %1821 = vmatpush1.msra.mxu0 0.0
    %1822 = vmatprep.subr.mxu0 0.0
    %1823 = vmatpush1.msra.mxu0 0.0
    %1824 = vmatprep.subr.mxu0 0.0
    %1825 = vmatpush1.msra.mxu0 0.0
    %1826 = vmatprep.subr.mxu0 0.0
    %1827 = vmatpush1.msra.mxu0 0.0
    %1828 = vmatprep.subr.mxu0 0.0
    %1829 = vmatpush1.msra.mxu0 0.0
    %1830 = vmatprep.subr.mxu0 0.0
    %1831 = vmatpush1.msra.mxu0 0.0
    %1832 = vmatprep.subr.mxu0 0.0
    %1833 = vmatpush1.msra.mxu0 0.0
    %1834 = vmatprep.subr.mxu0 0.0
    %1835 = vmatpush1.msra.mxu0 0.0
    %1836 = vmatprep.subr.mxu0 0.0
    %1837 = vmatpush1.msra.mxu0 0.0
    %1838 = vmatprep.subr.mxu0 0.0
    %1839 = vmatpush1.msra.mxu0 0.0
    %1840 = vmatprep.subr.mxu0 0.0
    %1841 = vmatpush1.msra.mxu0 0.0
    %1842 = vmatprep.subr.mxu0 0.0
    %1843 = vmatpush1.msra.mxu0 0.0
    %1844 = vmatprep.subr.mxu0 0.0
    %1845 = vmatpush1.msra.mxu0 0.0
    %1846 = vmatprep.subr.mxu0 0.0
    %1847 = vmatpush1.msra.mxu0 0.0
    %1848 = vmatprep.subr.mxu0 0.0
    %1849 = vmatpush1.msra.mxu0 0.0
    %1850 = vmatprep.subr.mxu0 0.0
    %1851 = vmatpush1.msra.mxu0 0.0
    %1852 = vmatprep.subr.mxu0 0.0
    %1853 = vmatpush1.msra.mxu0 0.0
    %1854 = vmatprep.subr.mxu0 0.0
    %1855 = vmatpush1.msra.mxu0 0.0
    %1856 = vmatprep.subr.mxu0 0.0
    %1857 = vmatpush1.msra.mxu0 0.0
    %1858 = vmatprep.subr.mxu0 0.0
    %1859 = vmatpush1.msra.mxu0 0.0
    %1860 = vmatprep.subr.mxu0 0.0
    %1861 = vmatpush1.msra.mxu0 0.0
    %1862 = vmatprep.subr.mxu0 0.0
    %1863 = vmatpush1.msra.mxu0 0.0
    %1864 = vmatprep.subr.mxu0 0.0
    %1865 = vmatpush1.msra.mxu0 0.0
    %1866 = vmatprep.subr.mxu0 0.0
    %1867 = vmatpush1.msra.mxu0 0.0
    %1868 = vmatprep.subr.mxu0 0.0
    %1869 = vmatpush1.msra.mxu0 0.0
    %1870 = vmatprep.subr.mxu0 0.0
    %1871 = vmatpush1.msra.mxu0 0.0
    %1872 = vmatprep.subr.mxu0 0.0
    %1873 = vmatpush1.msra.mxu0 0.0
    %1874 = vmatprep.subr.mxu0 0.0
    %1875 = vmatpush1.msra.mxu0 0.0
    %1876 = vmatprep.subr.mxu0 0.0
    %1877 = vmatpush1.msra.mxu0 0.0
    %1878 = vmatprep.mubr.f32.mxu0 0.0
    %1879 = vmatmul.mubr.f32.gmra.mrb[0].mxu0 %v1812
    %v1880 = vpop.f32.mrb[0].mxu0
    %v1881 = vadd.f32 0.0, %v1880
    %v1882 = vpop.f32.mrb[0].mxu0
    %1883 = vdwg.mxu0
    %v1885 = vsel %vm1041, %v1732, 0
    %1887 = vmatprep.subr.mxu0 0.0
    %1888 = vmatpush1.msra.mxu0 %v971
    %1889 = vmatprep.subr.mxu0 0.0
    %1890 = vmatpush1.msra.mxu0 0.0
    %1891 = vmatprep.subr.mxu0 0.0
    %1892 = vmatpush1.msra.mxu0 0.0
    %1893 = vmatprep.subr.mxu0 0.0
    %1894 = vmatpush1.msra.mxu0 0.0
    %1895 = vmatprep.subr.mxu0 0.0
    %1896 = vmatpush1.msra.mxu0 0.0
    %1897 = vmatprep.subr.mxu0 0.0
    %1898 = vmatpush1.msra.mxu0 0.0
    %1899 = vmatprep.subr.mxu0 0.0
    %1900 = vmatpush1.msra.mxu0 0.0
    %1901 = vmatprep.subr.mxu0 0.0
    %1902 = vmatpush1.msra.mxu0 0.0
    %1903 = vmatprep.subr.mxu0 0.0
    %1904 = vmatpush1.msra.mxu0 0.0
    %1905 = vmatprep.subr.mxu0 0.0
    %1906 = vmatpush1.msra.mxu0 0.0
    %1907 = vmatprep.subr.mxu0 0.0
    %1908 = vmatpush1.msra.mxu0 0.0
    %1909 = vmatprep.subr.mxu0 0.0
    %1910 = vmatpush1.msra.mxu0 0.0
    %1911 = vmatprep.subr.mxu0 0.0
    %1912 = vmatpush1.msra.mxu0 0.0
    %1913 = vmatprep.subr.mxu0 0.0
    %1914 = vmatpush1.msra.mxu0 0.0
    %1915 = vmatprep.subr.mxu0 0.0
    %1916 = vmatpush1.msra.mxu0 0.0
    %1917 = vmatprep.subr.mxu0 0.0
    %1918 = vmatpush1.msra.mxu0 0.0
    %1919 = vmatprep.subr.mxu0 0.0
    %1920 = vmatpush1.msra.mxu0 0.0
    %1921 = vmatprep.subr.mxu0 0.0
    %1922 = vmatpush1.msra.mxu0 0.0
    %1923 = vmatprep.subr.mxu0 0.0
    %1924 = vmatpush1.msra.mxu0 0.0
    %1925 = vmatprep.subr.mxu0 0.0
    %1926 = vmatpush1.msra.mxu0 0.0
    %1927 = vmatprep.subr.mxu0 0.0
    %1928 = vmatpush1.msra.mxu0 0.0
    %1929 = vmatprep.subr.mxu0 0.0
    %1930 = vmatpush1.msra.mxu0 0.0
    %1931 = vmatprep.subr.mxu0 0.0
    %1932 = vmatpush1.msra.mxu0 0.0
    %1933 = vmatprep.subr.mxu0 0.0
    %1934 = vmatpush1.msra.mxu0 0.0
    %1935 = vmatprep.subr.mxu0 0.0
    %1936 = vmatpush1.msra.mxu0 0.0
    %1937 = vmatprep.subr.mxu0 0.0
    %1938 = vmatpush1.msra.mxu0 0.0
    %1939 = vmatprep.subr.mxu0 0.0
    %1940 = vmatpush1.msra.mxu0 0.0
    %1941 = vmatprep.subr.mxu0 0.0
    %1942 = vmatpush1.msra.mxu0 0.0
    %1943 = vmatprep.subr.mxu0 0.0
    %1944 = vmatpush1.msra.mxu0 0.0
    %1945 = vmatprep.subr.mxu0 0.0
    %1946 = vmatpush1.msra.mxu0 0.0
    %1947 = vmatprep.subr.mxu0 0.0
    %1948 = vmatpush1.msra.mxu0 0.0
    %1949 = vmatprep.subr.mxu0 0.0
    %1950 = vmatpush1.msra.mxu0 0.0
    %1951 = vmatprep.mubr.f32.mxu0 0.0
    %1952 = vmatmul.mubr.f32.gmra.mrb[0].mxu0 %v1885
    %v1953 = vpop.f32.mrb[0].mxu0
    %v1954 = vadd.f32 0.0, %v1953
    %v1955 = vpop.f32.mrb[0].mxu0
    %1956 = vdwg.mxu0
    %v1958 = vsel %vm1041, %v1733, 0
    %1960 = vmatprep.subr.mxu0 0.0
    %1961 = vmatpush1.msra.mxu0 %v972
    %1962 = vmatprep.subr.mxu0 0.0
    %1963 = vmatpush1.msra.mxu0 0.0
    %1964 = vmatprep.subr.mxu0 0.0
    %1965 = vmatpush1.msra.mxu0 0.0
    %1966 = vmatprep.subr.mxu0 0.0
    %1967 = vmatpush1.msra.mxu0 0.0
    %1968 = vmatprep.subr.mxu0 0.0
    %1969 = vmatpush1.msra.mxu0 0.0
    %1970 = vmatprep.subr.mxu0 0.0
    %1971 = vmatpush1.msra.mxu0 0.0
    %1972 = vmatprep.subr.mxu0 0.0
    %1973 = vmatpush1.msra.mxu0 0.0
    %1974 = vmatprep.subr.mxu0 0.0
    %1975 = vmatpush1.msra.mxu0 0.0
    %1976 = vmatprep.subr.mxu0 0.0
    %1977 = vmatpush1.msra.mxu0 0.0
    %1978 = vmatprep.subr.mxu0 0.0
    %1979 = vmatpush1.msra.mxu0 0.0
    %1980 = vmatprep.subr.mxu0 0.0
    %1981 = vmatpush1.msra.mxu0 0.0
    %1982 = vmatprep.subr.mxu0 0.0
    %1983 = vmatpush1.msra.mxu0 0.0
    %1984 = vmatprep.subr.mxu0 0.0
    %1985 = vmatpush1.msra.mxu0 0.0
    %1986 = vmatprep.subr.mxu0 0.0
    %1987 = vmatpush1.msra.mxu0 0.0
    %1988 = vmatprep.subr.mxu0 0.0
    %1989 = vmatpush1.msra.mxu0 0.0
    %1990 = vmatprep.subr.mxu0 0.0
    %1991 = vmatpush1.msra.mxu0 0.0
    %1992 = vmatprep.subr.mxu0 0.0
    %1993 = vmatpush1.msra.mxu0 0.0
    %1994 = vmatprep.subr.mxu0 0.0
    %1995 = vmatpush1.msra.mxu0 0.0
    %1996 = vmatprep.subr.mxu0 0.0
    %1997 = vmatpush1.msra.mxu0 0.0
    %1998 = vmatprep.subr.mxu0 0.0
    %1999 = vmatpush1.msra.mxu0 0.0
    %2000 = vmatprep.subr.mxu0 0.0
    %2001 = vmatpush1.msra.mxu0 0.0
    %2002 = vmatprep.subr.mxu0 0.0
    %2003 = vmatpush1.msra.mxu0 0.0
    %2004 = vmatprep.subr.mxu0 0.0
    %2005 = vmatpush1.msra.mxu0 0.0
    %2006 = vmatprep.subr.mxu0 0.0
    %2007 = vmatpush1.msra.mxu0 0.0
    %2008 = vmatprep.subr.mxu0 0.0
    %2009 = vmatpush1.msra.mxu0 0.0
    %2010 = vmatprep.subr.mxu0 0.0
    %2011 = vmatpush1.msra.mxu0 0.0
    %2012 = vmatprep.subr.mxu0 0.0
    %2013 = vmatpush1.msra.mxu0 0.0
    %2014 = vmatprep.subr.mxu0 0.0
    %2015 = vmatpush1.msra.mxu0 0.0
    %2016 = vmatprep.subr.mxu0 0.0
    %2017 = vmatpush1.msra.mxu0 0.0
    %2018 = vmatprep.subr.mxu0 0.0
    %2019 = vmatpush1.msra.mxu0 0.0
    %2020 = vmatprep.subr.mxu0 0.0
    %2021 = vmatpush1.msra.mxu0 0.0
    %2022 = vmatprep.subr.mxu0 0.0
    %2023 = vmatpush1.msra.mxu0 0.0
    %2024 = vmatprep.mubr.f32.mxu0 0.0
    %2025 = vmatmul.mubr.f32.gmra.mrb[0].mxu0 %v1958
    %v2026 = vpop.f32.mrb[0].mxu0
    %v2027 = vadd.f32 0.0, %v2026
    %v2028 = vpop.f32.mrb[0].mxu0
    %2029 = vdwg.mxu0
    %v2031 = vsel %vm1041, %v1734, 0
    %2033 = vmatprep.subr.mxu0 0.0
    %2034 = vmatpush1.msra.mxu0 %v1037
    %2035 = vmatprep.subr.mxu0 0.0
    %2036 = vmatpush1.msra.mxu0 0.0
    %2037 = vmatprep.subr.mxu0 0.0
    %2038 = vmatpush1.msra.mxu0 0.0
    %2039 = vmatprep.subr.mxu0 0.0
    %2040 = vmatpush1.msra.mxu0 0.0
    %2041 = vmatprep.subr.mxu0 0.0
    %2042 = vmatpush1.msra.mxu0 0.0
    %2043 = vmatprep.subr.mxu0 0.0
    %2044 = vmatpush1.msra.mxu0 0.0
    %2045 = vmatprep.subr.mxu0 0.0
    %2046 = vmatpush1.msra.mxu0 0.0
    %2047 = vmatprep.subr.mxu0 0.0
    %2048 = vmatpush1.msra.mxu0 0.0
    %2049 = vmatprep.subr.mxu0 0.0
    %2050 = vmatpush1.msra.mxu0 0.0
    %2051 = vmatprep.subr.mxu0 0.0
    %2052 = vmatpush1.msra.mxu0 0.0
    %2053 = vmatprep.subr.mxu0 0.0
    %2054 = vmatpush1.msra.mxu0 0.0
    %2055 = vmatprep.subr.mxu0 0.0
    %2056 = vmatpush1.msra.mxu0 0.0
    %2057 = vmatprep.subr.mxu0 0.0
    %2058 = vmatpush1.msra.mxu0 0.0
    %2059 = vmatprep.subr.mxu0 0.0
    %2060 = vmatpush1.msra.mxu0 0.0
    %2061 = vmatprep.subr.mxu0 0.0
    %2062 = vmatpush1.msra.mxu0 0.0
    %2063 = vmatprep.subr.mxu0 0.0
    %2064 = vmatpush1.msra.mxu0 0.0
    %2065 = vmatprep.subr.mxu0 0.0
    %2066 = vmatpush1.msra.mxu0 0.0
    %2067 = vmatprep.subr.mxu0 0.0
    %2068 = vmatpush1.msra.mxu0 0.0
    %2069 = vmatprep.subr.mxu0 0.0
    %2070 = vmatpush1.msra.mxu0 0.0
    %2071 = vmatprep.subr.mxu0 0.0
    %2072 = vmatpush1.msra.mxu0 0.0
    %2073 = vmatprep.subr.mxu0 0.0
    %2074 = vmatpush1.msra.mxu0 0.0
    %2075 = vmatprep.subr.mxu0 0.0
    %2076 = vmatpush1.msra.mxu0 0.0
    %2077 = vmatprep.subr.mxu0 0.0
    %2078 = vmatpush1.msra.mxu0 0.0
    %2079 = vmatprep.subr.mxu0 0.0
    %2080 = vmatpush1.msra.mxu0 0.0
    %2081 = vmatprep.subr.mxu0 0.0
    %2082 = vmatpush1.msra.mxu0 0.0
    %2083 = vmatprep.subr.mxu0 0.0
    %2084 = vmatpush1.msra.mxu0 0.0
    %2085 = vmatprep.subr.mxu0 0.0
    %2086 = vmatpush1.msra.mxu0 0.0
    %2087 = vmatprep.subr.mxu0 0.0
    %2088 = vmatpush1.msra.mxu0 0.0
    %2089 = vmatprep.subr.mxu0 0.0
    %2090 = vmatpush1.msra.mxu0 0.0
    %2091 = vmatprep.subr.mxu0 0.0
    %2092 = vmatpush1.msra.mxu0 0.0
    %2093 = vmatprep.subr.mxu0 0.0
    %2094 = vmatpush1.msra.mxu0 0.0
    %2095 = vmatprep.subr.mxu0 0.0
    %2096 = vmatpush1.msra.mxu0 0.0
    %2097 = vmatprep.mubr.f32.mxu0 0.0
    %2098 = vmatmul.mubr.f32.gmra.mrb[0].mxu0 %v2031
    %v2099 = vpop.f32.mrb[0].mxu0
    %v2100 = vadd.f32 0.0, %v2099
    %v2101 = vpop.f32.mrb[0].mxu0
    %2102 = vdwg.mxu0
    %v2104 = vsel %vm1041, %v1735, 0
    %2106 = vmatprep.subr.mxu0 0.0
    %2107 = vmatpush1.msra.mxu0 %v1038
    %2108 = vmatprep.subr.mxu0 0.0
    %2109 = vmatpush1.msra.mxu0 0.0
    %2110 = vmatprep.subr.mxu0 0.0
    %2111 = vmatpush1.msra.mxu0 0.0
    %2112 = vmatprep.subr.mxu0 0.0
    %2113 = vmatpush1.msra.mxu0 0.0
    %2114 = vmatprep.subr.mxu0 0.0
    %2115 = vmatpush1.msra.mxu0 0.0
    %2116 = vmatprep.subr.mxu0 0.0
    %2117 = vmatpush1.msra.mxu0 0.0
    %2118 = vmatprep.subr.mxu0 0.0
    %2119 = vmatpush1.msra.mxu0 0.0
    %2120 = vmatprep.subr.mxu0 0.0
    %2121 = vmatpush1.msra.mxu0 0.0
    %2122 = vmatprep.subr.mxu0 0.0
    %2123 = vmatpush1.msra.mxu0 0.0
    %2124 = vmatprep.subr.mxu0 0.0
    %2125 = vmatpush1.msra.mxu0 0.0
    %2126 = vmatprep.subr.mxu0 0.0
    %2127 = vmatpush1.msra.mxu0 0.0
    %2128 = vmatprep.subr.mxu0 0.0
    %2129 = vmatpush1.msra.mxu0 0.0
    %2130 = vmatprep.subr.mxu0 0.0
    %2131 = vmatpush1.msra.mxu0 0.0
    %2132 = vmatprep.subr.mxu0 0.0
    %2133 = vmatpush1.msra.mxu0 0.0
    %2134 = vmatprep.subr.mxu0 0.0
    %2135 = vmatpush1.msra.mxu0 0.0
    %2136 = vmatprep.subr.mxu0 0.0
    %2137 = vmatpush1.msra.mxu0 0.0
    %2138 = vmatprep.subr.mxu0 0.0
    %2139 = vmatpush1.msra.mxu0 0.0
    %2140 = vmatprep.subr.mxu0 0.0
    %2141 = vmatpush1.msra.mxu0 0.0
    %2142 = vmatprep.subr.mxu0 0.0
    %2143 = vmatpush1.msra.mxu0 0.0
    %2144 = vmatprep.subr.mxu0 0.0
    %2145 = vmatpush1.msra.mxu0 0.0
    %2146 = vmatprep.subr.mxu0 0.0
    %2147 = vmatpush1.msra.mxu0 0.0
    %2148 = vmatprep.subr.mxu0 0.0
    %2149 = vmatpush1.msra.mxu0 0.0
    %2150 = vmatprep.subr.mxu0 0.0
    %2151 = vmatpush1.msra.mxu0 0.0
    %2152 = vmatprep.subr.mxu0 0.0
    %2153 = vmatpush1.msra.mxu0 0.0
    %2154 = vmatprep.subr.mxu0 0.0
    %2155 = vmatpush1.msra.mxu0 0.0
    %2156 = vmatprep.subr.mxu0 0.0
    %2157 = vmatpush1.msra.mxu0 0.0
    %2158 = vmatprep.subr.mxu0 0.0
    %2159 = vmatpush1.msra.mxu0 0.0
    %2160 = vmatprep.subr.mxu0 0.0
    %2161 = vmatpush1.msra.mxu0 0.0
    %2162 = vmatprep.subr.mxu0 0.0
    %2163 = vmatpush1.msra.mxu0 0.0
    %2164 = vmatprep.subr.mxu0 0.0
    %2165 = vmatpush1.msra.mxu0 0.0
    %2166 = vmatprep.subr.mxu0 0.0
    %2167 = vmatpush1.msra.mxu0 0.0
    %2168 = vmatprep.subr.mxu0 0.0
    %2169 = vmatpush1.msra.mxu0 0.0
    %2170 = vmatprep.mubr.f32.mxu0 0.0
    %2171 = vmatmul.mubr.f32.gmra.mrb[0].mxu0 %v2104
    %v2172 = vpop.f32.mrb[0].mxu0
    %v2173 = vadd.f32 0.0, %v2172
    %v2174 = vpop.f32.mrb[0].mxu0
    %2175 = vdwg.mxu0
    %v2177 = vsel %vm1041, %v1736, 0
    %2179 = vmatprep.subr.mxu0 0.0
    %2180 = vmatpush1.msra.mxu0 %v1039
    %2181 = vmatprep.subr.mxu0 0.0
    %2182 = vmatpush1.msra.mxu0 0.0
    %2183 = vmatprep.subr.mxu0 0.0
    %2184 = vmatpush1.msra.mxu0 0.0
    %2185 = vmatprep.subr.mxu0 0.0
    %2186 = vmatpush1.msra.mxu0 0.0
    %2187 = vmatprep.subr.mxu0 0.0
    %2188 = vmatpush1.msra.mxu0 0.0
    %2189 = vmatprep.subr.mxu0 0.0
    %2190 = vmatpush1.msra.mxu0 0.0
    %2191 = vmatprep.subr.mxu0 0.0
    %2192 = vmatpush1.msra.mxu0 0.0
    %2193 = vmatprep.subr.mxu0 0.0
    %2194 = vmatpush1.msra.mxu0 0.0
    %2195 = vmatprep.subr.mxu0 0.0
    %2196 = vmatpush1.msra.mxu0 0.0
    %2197 = vmatprep.subr.mxu0 0.0
    %2198 = vmatpush1.msra.mxu0 0.0
    %2199 = vmatprep.subr.mxu0 0.0
    %2200 = vmatpush1.msra.mxu0 0.0
    %2201 = vmatprep.subr.mxu0 0.0
    %2202 = vmatpush1.msra.mxu0 0.0
    %2203 = vmatprep.subr.mxu0 0.0
    %2204 = vmatpush1.msra.mxu0 0.0
    %2205 = vmatprep.subr.mxu0 0.0
    %2206 = vmatpush1.msra.mxu0 0.0
    %2207 = vmatprep.subr.mxu0 0.0
    %2208 = vmatpush1.msra.mxu0 0.0
    %2209 = vmatprep.subr.mxu0 0.0
    %2210 = vmatpush1.msra.mxu0 0.0
    %2211 = vmatprep.subr.mxu0 0.0
    %2212 = vmatpush1.msra.mxu0 0.0
    %2213 = vmatprep.subr.mxu0 0.0
    %2214 = vmatpush1.msra.mxu0 0.0
    %2215 = vmatprep.subr.mxu0 0.0
    %2216 = vmatpush1.msra.mxu0 0.0
    %2217 = vmatprep.subr.mxu0 0.0
    %2218 = vmatpush1.msra.mxu0 0.0
    %2219 = vmatprep.subr.mxu0 0.0
    %2220 = vmatpush1.msra.mxu0 0.0
    %2221 = vmatprep.subr.mxu0 0.0
    %2222 = vmatpush1.msra.mxu0 0.0
    %2223 = vmatprep.subr.mxu0 0.0
    %2224 = vmatpush1.msra.mxu0 0.0
    %2225 = vmatprep.subr.mxu0 0.0
    %2226 = vmatpush1.msra.mxu0 0.0
    %2227 = vmatprep.subr.mxu0 0.0
    %2228 = vmatpush1.msra.mxu0 0.0
    %2229 = vmatprep.subr.mxu0 0.0
    %2230 = vmatpush1.msra.mxu0 0.0
    %2231 = vmatprep.subr.mxu0 0.0
    %2232 = vmatpush1.msra.mxu0 0.0
    %2233 = vmatprep.subr.mxu0 0.0
    %2234 = vmatpush1.msra.mxu0 0.0
    %2235 = vmatprep.subr.mxu0 0.0
    %2236 = vmatpush1.msra.mxu0 0.0
    %2237 = vmatprep.subr.mxu0 0.0
    %2238 = vmatpush1.msra.mxu0 0.0
    %2239 = vmatprep.subr.mxu0 0.0
    %2240 = vmatpush1.msra.mxu0 0.0
    %2241 = vmatprep.subr.mxu0 0.0
    %2242 = vmatpush1.msra.mxu0 0.0
    %2243 = vmatprep.mubr.f32.mxu0 0.0
    %2244 = vmatmul.mubr.f32.gmra.mrb[0].mxu0 %v2177
    %v2245 = vpop.f32.mrb[0].mxu0
    %v2246 = vadd.f32 0.0, %v2245
    %v2247 = vpop.f32.mrb[0].mxu0
    %2248 = vdwg.mxu0
    %v2250 = vsel %vm1041, %v1737, 0
    %2252 = vmatprep.subr.mxu0 0.0
    %2253 = vmatpush1.msra.mxu0 %v1040
    %2254 = vmatprep.subr.mxu0 0.0
    %2255 = vmatpush1.msra.mxu0 0.0
    %2256 = vmatprep.subr.mxu0 0.0
    %2257 = vmatpush1.msra.mxu0 0.0
    %2258 = vmatprep.subr.mxu0 0.0
    %2259 = vmatpush1.msra.mxu0 0.0
    %2260 = vmatprep.subr.mxu0 0.0
    %2261 = vmatpush1.msra.mxu0 0.0
    %2262 = vmatprep.subr.mxu0 0.0
    %2263 = vmatpush1.msra.mxu0 0.0
    %2264 = vmatprep.subr.mxu0 0.0
    %2265 = vmatpush1.msra.mxu0 0.0
    %2266 = vmatprep.subr.mxu0 0.0
    %2267 = vmatpush1.msra.mxu0 0.0
    %2268 = vmatprep.subr.mxu0 0.0
    %2269 = vmatpush1.msra.mxu0 0.0
    %2270 = vmatprep.subr.mxu0 0.0
    %2271 = vmatpush1.msra.mxu0 0.0
    %2272 = vmatprep.subr.mxu0 0.0
    %2273 = vmatpush1.msra.mxu0 0.0
    %2274 = vmatprep.subr.mxu0 0.0
    %2275 = vmatpush1.msra.mxu0 0.0
    %2276 = vmatprep.subr.mxu0 0.0
    %2277 = vmatpush1.msra.mxu0 0.0
    %2278 = vmatprep.subr.mxu0 0.0
    %2279 = vmatpush1.msra.mxu0 0.0
    %2280 = vmatprep.subr.mxu0 0.0
    %2281 = vmatpush1.msra.mxu0 0.0
    %2282 = vmatprep.subr.mxu0 0.0
    %2283 = vmatpush1.msra.mxu0 0.0
    %2284 = vmatprep.subr.mxu0 0.0
    %2285 = vmatpush1.msra.mxu0 0.0
    %2286 = vmatprep.subr.mxu0 0.0
    %2287 = vmatpush1.msra.mxu0 0.0
    %2288 = vmatprep.subr.mxu0 0.0
    %2289 = vmatpush1.msra.mxu0 0.0
    %2290 = vmatprep.subr.mxu0 0.0
    %2291 = vmatpush1.msra.mxu0 0.0
    %2292 = vmatprep.subr.mxu0 0.0
    %2293 = vmatpush1.msra.mxu0 0.0
    %2294 = vmatprep.subr.mxu0 0.0
    %2295 = vmatpush1.msra.mxu0 0.0
    %2296 = vmatprep.subr.mxu0 0.0
    %2297 = vmatpush1.msra.mxu0 0.0
    %2298 = vmatprep.subr.mxu0 0.0
    %2299 = vmatpush1.msra.mxu0 0.0
    %2300 = vmatprep.subr.mxu0 0.0
    %2301 = vmatpush1.msra.mxu0 0.0
    %2302 = vmatprep.subr.mxu0 0.0
    %2303 = vmatpush1.msra.mxu0 0.0
    %2304 = vmatprep.subr.mxu0 0.0
    %2305 = vmatpush1.msra.mxu0 0.0
    %2306 = vmatprep.subr.mxu0 0.0
    %2307 = vmatpush1.msra.mxu0 0.0
    %2308 = vmatprep.subr.mxu0 0.0
    %2309 = vmatpush1.msra.mxu0 0.0
    %2310 = vmatprep.subr.mxu0 0.0
    %2311 = vmatpush1.msra.mxu0 0.0
    %2312 = vmatprep.subr.mxu0 0.0
    %2313 = vmatpush1.msra.mxu0 0.0
    %2314 = vmatprep.subr.mxu0 0.0
    %2315 = vmatpush1.msra.mxu0 0.0
    %2316 = vmatprep.mubr.f32.mxu0 0.0
    %2317 = vmatmul.mubr.f32.gmra.mrb[0].mxu0 %v2250
    %v2318 = vpop.f32.mrb[0].mxu0
    %v2319 = vadd.f32 0.0, %v2318
    %v2320 = vpop.f32.mrb[0].mxu0
    %2321 = vdwg.mxu0
    %v2322 = vcombine.low %v1808, %v1954
    %v2323 = vcombine.high %v1808, %v1954
    %v2325 = vunpack.c.l.s4 1983009808
    %v2326 = vunpack.c.0.s8 %v2325
    %v2327 = vlaneseq
    %v2328 = vshrl.u32 %v2327, 7
    %v2329 = vsub.s32 %v2326, %v2328
    %v2330 = vrot.slane %v2322, %v2329
    %v2332 = vunpack.c.l.s4 1983009808
    %v2333 = vunpack.c.0.s8 %v2332
    %v2334 = vlaneseq
    %v2335 = vshrl.u32 %v2334, 7
    %v2336 = vsub.s32 %v2333, %v2335
    %v2337 = vrot.slane %v2323, %v2336
    %v2338 = vcombine.low %v1881, %v2027
    %v2339 = vcombine.high %v1881, %v2027
    %v2341 = vunpack.c.l.s4 1983009808
    %v2342 = vunpack.c.0.s8 %v2341
    %v2343 = vlaneseq
    %v2344 = vshrl.u32 %v2343, 7
    %v2345 = vsub.s32 %v2342, %v2344
    %v2346 = vrot.slane %v2338, %v2345
    %v2348 = vunpack.c.l.s4 1983009808
    %v2349 = vunpack.c.0.s8 %v2348
    %v2350 = vlaneseq
    %v2351 = vshrl.u32 %v2350, 7
    %v2352 = vsub.s32 %v2349, %v2351
    %v2353 = vrot.slane %v2339, %v2352
    %v2354 = vcombine.low %v2330, %v2346
    %v2355 = vcombine.high %v2330, %v2346
    %v2357 = vunpack.c.l.s4 1934713408
    %v2358 = vunpack.c.0.s8 %v2357
    %v2359 = vlaneseq
    %v2360 = vshrl.u32 %v2359, 7
    %v2361 = vsub.s32 %v2358, %v2360
    %v2362 = vrot.slane %v2354, %v2361
    %v2364 = vunpack.c.l.s4 1934713408
    %v2365 = vunpack.c.0.s8 %v2364
    %v2366 = vlaneseq
    %v2367 = vshrl.u32 %v2366, 7
    %v2368 = vsub.s32 %v2365, %v2367
    %v2369 = vrot.slane %v2355, %v2368
    %v2370 = vcombine.low %v2337, %v2353
    %v2371 = vcombine.high %v2337, %v2353
    %v2373 = vunpack.c.l.s4 1934713408
    %v2374 = vunpack.c.0.s8 %v2373
    %v2375 = vlaneseq
    %v2376 = vshrl.u32 %v2375, 7
    %v2377 = vsub.s32 %v2374, %v2376
    %v2378 = vrot.slane %v2370, %v2377
    %v2380 = vunpack.c.l.s4 1934713408
    %v2381 = vunpack.c.0.s8 %v2380
    %v2382 = vlaneseq
    %v2383 = vshrl.u32 %v2382, 7
    %v2384 = vsub.s32 %v2381, %v2383
    %v2385 = vrot.slane %v2371, %v2384
    %v2386 = vcombine.high %v2362, 0.0
    %v2387 = vcombine.high %v2369, 0.0
    %v2388 = vcombine.high %v2378, 0.0
    %v2389 = vcombine.high %v2385, 0.0
    %v2390 = vcombine.low %v2100, %v2246
    %v2391 = vcombine.high %v2100, %v2246
    %v2393 = vunpack.c.l.s4 1983009808
    %v2394 = vunpack.c.0.s8 %v2393
    %v2395 = vlaneseq
    %v2396 = vshrl.u32 %v2395, 7
    %v2397 = vsub.s32 %v2394, %v2396
    %v2398 = vrot.slane %v2390, %v2397
    %v2400 = vunpack.c.l.s4 1983009808
    %v2401 = vunpack.c.0.s8 %v2400
    %v2402 = vlaneseq
    %v2403 = vshrl.u32 %v2402, 7
    %v2404 = vsub.s32 %v2401, %v2403
    %v2405 = vrot.slane %v2391, %v2404
    %v2406 = vcombine.low %v2173, %v2319
    %v2407 = vcombine.high %v2173, %v2319
    %v2409 = vunpack.c.l.s4 1983009808
    %v2410 = vunpack.c.0.s8 %v2409
    %v2411 = vlaneseq
    %v2412 = vshrl.u32 %v2411, 7
    %v2413 = vsub.s32 %v2410, %v2412
    %v2414 = vrot.slane %v2406, %v2413
    %v2416 = vunpack.c.l.s4 1983009808
    %v2417 = vunpack.c.0.s8 %v2416
    %v2418 = vlaneseq
    %v2419 = vshrl.u32 %v2418, 7
    %v2420 = vsub.s32 %v2417, %v2419
    %v2421 = vrot.slane %v2407, %v2420
    %v2422 = vcombine.low %v2398, %v2414
    %v2423 = vcombine.high %v2398, %v2414
    %v2425 = vunpack.c.l.s4 1934713408
    %v2426 = vunpack.c.0.s8 %v2425
    %v2427 = vlaneseq
    %v2428 = vshrl.u32 %v2427, 7
    %v2429 = vsub.s32 %v2426, %v2428
    %v2430 = vrot.slane %v2422, %v2429
    %v2432 = vunpack.c.l.s4 1934713408
    %v2433 = vunpack.c.0.s8 %v2432
    %v2434 = vlaneseq
    %v2435 = vshrl.u32 %v2434, 7
    %v2436 = vsub.s32 %v2433, %v2435
    %v2437 = vrot.slane %v2423, %v2436
    %v2438 = vcombine.low %v2405, %v2421
    %v2439 = vcombine.high %v2405, %v2421
    %v2441 = vunpack.c.l.s4 1934713408
    %v2442 = vunpack.c.0.s8 %v2441
    %v2443 = vlaneseq
    %v2444 = vshrl.u32 %v2443, 7
    %v2445 = vsub.s32 %v2442, %v2444
    %v2446 = vrot.slane %v2438, %v2445
    %v2448 = vunpack.c.l.s4 1934713408
    %v2449 = vunpack.c.0.s8 %v2448
    %v2450 = vlaneseq
    %v2451 = vshrl.u32 %v2450, 7
    %v2452 = vsub.s32 %v2449, %v2451
    %v2453 = vrot.slane %v2439, %v2452
    %v2454 = vcombine.high %v2430, 0.0
    %v2455 = vcombine.high %v2437, 0.0
    %v2456 = vcombine.high %v2446, 0.0
    %v2457 = vcombine.high %v2453, 0.0
    %v2458 = vcombine.low %v2362, %v2369
    %v2460 = vunpack.c.l.s4 1983009808
    %v2461 = vunpack.c.0.s8 %v2460
    %v2462 = vlaneseq
    %v2463 = vshrl.u32 %v2462, 7
    %v2464 = vsub.s32 %v2461, %v2463
    %v2465 = vrot.slane %v2458, %v2464
    %v2466 = vcombine.low %v2386, %v2387
    %v2468 = vunpack.c.l.s4 1983009808
    %v2469 = vunpack.c.0.s8 %v2468
    %v2470 = vlaneseq
    %v2471 = vshrl.u32 %v2470, 7
    %v2472 = vsub.s32 %v2469, %v2471
    %v2473 = vrot.slane %v2466, %v2472
    %v2474 = vcombine.low %v2378, %v2385
    %v2476 = vunpack.c.l.s4 1983009808
    %v2477 = vunpack.c.0.s8 %v2476
    %v2478 = vlaneseq
    %v2479 = vshrl.u32 %v2478, 7
    %v2480 = vsub.s32 %v2477, %v2479
    %v2481 = vrot.slane %v2474, %v2480
    %v2482 = vcombine.low %v2388, %v2389
    %v2484 = vunpack.c.l.s4 1983009808
    %v2485 = vunpack.c.0.s8 %v2484
    %v2486 = vlaneseq
    %v2487 = vshrl.u32 %v2486, 7
    %v2488 = vsub.s32 %v2485, %v2487
    %v2489 = vrot.slane %v2482, %v2488
    %v2490 = vcombine.low %v2465, %v2473
    %v2491 = vcombine.high %v2465, %v2473
    %v2493 = vunpack.c.l.s4 1934713408
    %v2494 = vunpack.c.0.s8 %v2493
    %v2495 = vlaneseq
    %v2496 = vshrl.u32 %v2495, 7
    %v2497 = vsub.s32 %v2494, %v2496
    %v2498 = vrot.slane %v2490, %v2497
    %v2500 = vunpack.c.l.s4 1934713408
    %v2501 = vunpack.c.0.s8 %v2500
    %v2502 = vlaneseq
    %v2503 = vshrl.u32 %v2502, 7
    %v2504 = vsub.s32 %v2501, %v2503
    %v2505 = vrot.slane %v2491, %v2504
    %v2506 = vcombine.low %v2481, %v2489
    %v2507 = vcombine.high %v2481, %v2489
    %v2509 = vunpack.c.l.s4 1934713408
    %v2510 = vunpack.c.0.s8 %v2509
    %v2511 = vlaneseq
    %v2512 = vshrl.u32 %v2511, 7
    %v2513 = vsub.s32 %v2510, %v2512
    %v2514 = vrot.slane %v2506, %v2513
    %v2516 = vunpack.c.l.s4 1934713408
    %v2517 = vunpack.c.0.s8 %v2516
    %v2518 = vlaneseq
    %v2519 = vshrl.u32 %v2518, 7
    %v2520 = vsub.s32 %v2517, %v2519
    %v2521 = vrot.slane %v2507, %v2520
    %v2522 = vcombine.low %v2498, %v2514
    %v2523 = vcombine.high %v2498, %v2514
    %v2524 = vcombine.low %v2505, %v2521
    %v2525 = vcombine.high %v2505, %v2521
    %v2526 = vcombine.low %v2430, %v2437
    %v2528 = vunpack.c.l.s4 1983009808
    %v2529 = vunpack.c.0.s8 %v2528
    %v2530 = vlaneseq
    %v2531 = vshrl.u32 %v2530, 7
    %v2532 = vsub.s32 %v2529, %v2531
    %v2533 = vrot.slane %v2526, %v2532
    %v2534 = vcombine.low %v2454, %v2455
    %v2536 = vunpack.c.l.s4 1983009808
    %v2537 = vunpack.c.0.s8 %v2536
    %v2538 = vlaneseq
    %v2539 = vshrl.u32 %v2538, 7
    %v2540 = vsub.s32 %v2537, %v2539
    %v2541 = vrot.slane %v2534, %v2540
    %v2542 = vcombine.low %v2446, %v2453
    %v2544 = vunpack.c.l.s4 1983009808
    %v2545 = vunpack.c.0.s8 %v2544
    %v2546 = vlaneseq
    %v2547 = vshrl.u32 %v2546, 7
    %v2548 = vsub.s32 %v2545, %v2547
    %v2549 = vrot.slane %v2542, %v2548
    %v2550 = vcombine.low %v2456, %v2457
    %v2552 = vunpack.c.l.s4 1983009808
    %v2553 = vunpack.c.0.s8 %v2552
    %v2554 = vlaneseq
    %v2555 = vshrl.u32 %v2554, 7
    %v2556 = vsub.s32 %v2553, %v2555
    %v2557 = vrot.slane %v2550, %v2556
    %v2558 = vcombine.low %v2533, %v2541
    %v2559 = vcombine.high %v2533, %v2541
    %v2561 = vunpack.c.l.s4 1934713408
    %v2562 = vunpack.c.0.s8 %v2561
    %v2563 = vlaneseq
    %v2564 = vshrl.u32 %v2563, 7
    %v2565 = vsub.s32 %v2562, %v2564
    %v2566 = vrot.slane %v2558, %v2565
    %v2568 = vunpack.c.l.s4 1934713408
    %v2569 = vunpack.c.0.s8 %v2568
    %v2570 = vlaneseq
    %v2571 = vshrl.u32 %v2570, 7
    %v2572 = vsub.s32 %v2569, %v2571
    %v2573 = vrot.slane %v2559, %v2572
    %v2574 = vcombine.low %v2549, %v2557
    %v2575 = vcombine.high %v2549, %v2557
    %v2577 = vunpack.c.l.s4 1934713408
    %v2578 = vunpack.c.0.s8 %v2577
    %v2579 = vlaneseq
    %v2580 = vshrl.u32 %v2579, 7
    %v2581 = vsub.s32 %v2578, %v2580
    %v2582 = vrot.slane %v2574, %v2581
    %v2584 = vunpack.c.l.s4 1934713408
    %v2585 = vunpack.c.0.s8 %v2584
    %v2586 = vlaneseq
    %v2587 = vshrl.u32 %v2586, 7
    %v2588 = vsub.s32 %v2585, %v2587
    %v2589 = vrot.slane %v2575, %v2588
    %v2590 = vcombine.low %v2566, %v2582
    %v2591 = vcombine.high %v2566, %v2582
    %v2592 = vcombine.low %v2573, %v2589
    %v2593 = vcombine.high %v2573, %v2589
    %2596 = vrot.lane.b32.xlu0 %v2523, 8
    %v2597 = vpop.permute.xlu0 %2596
    %2598 = vrot.lane.b32.xlu0 %v2591, 8
    %v2599 = vpop.permute.xlu0 %2598
    %2604 = vrot.lane.b32.xlu0 %v2524, 16
    %v2605 = vpop.permute.xlu0 %2604
    %2606 = vrot.lane.b32.xlu0 %v2592, 16
    %v2607 = vpop.permute.xlu0 %2606
    %2612 = vrot.lane.b32.xlu0 %v2525, 24
    %v2613 = vpop.permute.xlu0 %2612
    %2614 = vrot.lane.b32.xlu0 %v2593, 24
    %v2615 = vpop.permute.xlu0 %2614
    %v2618 = vsel %vm1041, %v2522, %v2597
    %v2619 = vsel %vm1041, %v2590, %v2599
    %vm2620 = vcmask 130048
    %v2621 = vsel %vm2620, %v2618, %v2605
    %v2622 = vsel %vm2620, %v2619, %v2607
    %vm2623 = vcmask 195584
    %v2624 = vsel %vm2623, %v2621, %v2613
    %v2625 = vsel %vm2623, %v2622, %v2615
    %v2626 = vld [vmem:[#allocation7] sm:$0xff]
    %v2627 = vld [vmem:[#allocation7 + $0x8] sm:$0xff]
    %v2628 = vld [vmem:[#allocation7 + $0x10] sm:$0xff]
    %v2629 = vld [vmem:[#allocation7 + $0x18] sm:$0xff]
    %v2630 = vld [vmem:[%s4] sm:$0x1]
    %v2632 = vlaneseq
    %v2633 = vshrl.u32 %v2632, 7
    %v2634 = vsub.s32 0, %v2633
    %v2635 = vrot.slane %v2630, %v2634
    %v2638 = vsel %vm75, %v2624, 0
    %v2641 = vsel %vm75, %v2625, 0
    %2643 = vmatprep.subr.mxu0 0.0
    %2644 = vmatpush1.msra.mxu0 %v2626
    %2645 = vmatprep.subr.mxu0 0.0
    %2646 = vmatpush1.msra.mxu0 %v2627
    %2647 = vmatprep.subr.mxu0 0.0
    %2648 = vmatpush1.msra.mxu0 %v2628
    %2649 = vmatprep.subr.mxu0 0.0
    %2650 = vmatpush1.msra.mxu0 %v2629
    %2651 = vmatprep.subr.mxu0 0.0
    %2652 = vmatpush1.msra.mxu0 0.0
    %2653 = vmatprep.subr.mxu0 0.0
    %2654 = vmatpush1.msra.mxu0 0.0
    %2655 = vmatprep.subr.mxu0 0.0
    %2656 = vmatpush1.msra.mxu0 0.0
    %2657 = vmatprep.subr.mxu0 0.0
    %2658 = vmatpush1.msra.mxu0 0.0
    %2659 = vmatprep.subr.mxu0 0.0
    %2660 = vmatpush1.msra.mxu0 0.0
    %2661 = vmatprep.subr.mxu0 0.0
    %2662 = vmatpush1.msra.mxu0 0.0
    %2663 = vmatprep.subr.mxu0 0.0
    %2664 = vmatpush1.msra.mxu0 0.0
    %2665 = vmatprep.subr.mxu0 0.0
    %2666 = vmatpush1.msra.mxu0 0.0
    %2667 = vmatprep.subr.mxu0 0.0
    %2668 = vmatpush1.msra.mxu0 0.0
    %2669 = vmatprep.subr.mxu0 0.0
    %2670 = vmatpush1.msra.mxu0 0.0
    %2671 = vmatprep.subr.mxu0 0.0
    %2672 = vmatpush1.msra.mxu0 0.0
    %2673 = vmatprep.subr.mxu0 0.0
    %2674 = vmatpush1.msra.mxu0 0.0
    %2675 = vmatprep.subr.mxu0 0.0
    %2676 = vmatpush1.msra.mxu0 0.0
    %2677 = vmatprep.subr.mxu0 0.0
    %2678 = vmatpush1.msra.mxu0 0.0
    %2679 = vmatprep.subr.mxu0 0.0
    %2680 = vmatpush1.msra.mxu0 0.0
    %2681 = vmatprep.subr.mxu0 0.0
    %2682 = vmatpush1.msra.mxu0 0.0
    %2683 = vmatprep.subr.mxu0 0.0
    %2684 = vmatpush1.msra.mxu0 0.0
    %2685 = vmatprep.subr.mxu0 0.0
    %2686 = vmatpush1.msra.mxu0 0.0
    %2687 = vmatprep.subr.mxu0 0.0
    %2688 = vmatpush1.msra.mxu0 0.0
    %2689 = vmatprep.subr.mxu0 0.0
    %2690 = vmatpush1.msra.mxu0 0.0
    %2691 = vmatprep.subr.mxu0 0.0
    %2692 = vmatpush1.msra.mxu0 0.0
    %2693 = vmatprep.subr.mxu0 0.0
    %2694 = vmatpush1.msra.mxu0 0.0
    %2695 = vmatprep.subr.mxu0 0.0
    %2696 = vmatpush1.msra.mxu0 0.0
    %2697 = vmatprep.subr.mxu0 0.0
    %2698 = vmatpush1.msra.mxu0 0.0
    %2699 = vmatprep.subr.mxu0 0.0
    %2700 = vmatpush1.msra.mxu0 0.0
    %2701 = vmatprep.subr.mxu0 0.0
    %2702 = vmatpush1.msra.mxu0 0.0
    %2703 = vmatprep.subr.mxu0 0.0
    %2704 = vmatpush1.msra.mxu0 0.0
    %2705 = vmatprep.subr.mxu0 0.0
    %2706 = vmatpush1.msra.mxu0 0.0
    %2707 = vmatprep.mubr.f32.mxu0 0.0
    %2708 = vmatmul.mubr.f32.gmra.mrb[0].mxu0 %v2638
    %v2709 = vpop.f32.mrb[0].mxu0
    %v2710 = vadd.f32 %v2635, %v2709
    %v2711 = vpop.f32.mrb[0].mxu0
    %2712 = vmatprep.mubr.f32.mxu0 0.0
    %2713 = vmatmul.mubr.f32.gmra.mrb[0].mxu0 %v2641
    %v2714 = vpop.f32.mrb[0].mxu0
    %v2715 = vadd.f32 %v2635, %v2714
    %v2716 = vpop.f32.mrb[0].mxu0
    %2717 = vdwg.mxu0
    %2718 = vst.msk [vmem:[#allocation8] sm:$0xff] %vm75, %v2710
    %2719 = vst.msk [vmem:[#allocation8 + $0x8] sm:$0xff] %vm75, %v2715
    // Predicated region
    $region34: #{tpu_custom_call.1} parent=1 // pred_check
      _
    $region35: #{tpu_custom_call.1} parent=1 // pred_check_branch
      %2721 = sbr.rel (0) target = $region37
    $region36: #{tpu_custom_call.1} parent=1 // pred_region
      %s2723 = ssub.s32 256, 256
      %2724 = vsyncadd [#allocation4], %s2723
      %s2725 = sshll.u32 [#allocation8], 4
      %s2726 = int_to_ptr.vmem [resolvable:$true] %s2725
      %2731 = dma.vmem_to_hbm [thread:$0]  %s2726, 256, %s5, [#allocation4], 128, 128, 8
    $region37: #{tpu_custom_call.1} parent=1 // pred_fallthru
      _
    // Predicated region
    $region38: #{tpu_custom_call.1} parent=1 // pred_check
      _
    $region39: #{tpu_custom_call.1} parent=1 // pred_check_branch
      %2733 = sbr.rel (0) target = $region41
    $region40: #{tpu_custom_call.1} parent=1 // pred_region
      %2734 = dma.done [#allocation4], 256
    $region41: #{tpu_custom_call.1} parent=1 // pred_fallthru
      _
    %2735 = vsyncpa [#allocation3], 1
    %2736 = vsyncpa [#allocation6], 1
    %2737 = vsyncpa [#allocation4], 1

</llo_original>
